<compile_context>
chip_gen: v7x
topology: tpu7x:2x2x1
jax: 0.10.0
libtpu: 0.0.40
codegen_flags: <defaults>
</compile_context>

<pallas_src>
import functools

import jax
import jax.numpy as jnp
from jax import lax
from jax.experimental import pallas as pl
from jax.experimental.pallas import tpu as pltpu

_EPS = 1e-5
_LANES = 128


def _cdiv(a: int, b: int) -> int:
    return -(-a // b)


def _vmem_limit_bytes() -> int:
    """Chip-aware VMEM limit: half of physical capacity, capped at 64 MiB."""
    try:
        cap = int(getattr(pltpu.get_tpu_info(), "vmem_capacity_bytes"))
    except Exception:
        # Query unavailable (e.g. interpret mode) -> conservative, v7x-safe assumption.
        cap = 64 * 1024 * 1024
    return min(cap // 2, 64 * 1024 * 1024)


def _choose_row_tile(rows: int, width: int, vmem_limit: int) -> int:
    """Row tile sized so the f32 working tile is a few MiB (amortizes the ~0.35us/step
    pipeline overhead) while keeping ~>=8 grid steps on large inputs (v7x megacore) and
    the total footprint (2x double-buffered in/out + f32 temporaries) under vmem_limit."""
    if rows < 8:
        return rows
    row_bytes_f32 = width * 4
    # ~1/16 of the limit for the f32 x tile leaves room for the double-buffered in/out
    # DMA buffers (at io dtype) plus the f32 temporaries inside the kernel body.
    tm = max(8, (vmem_limit // 16 // row_bytes_f32) // 8 * 8)
    # Keep at least ~8 grid steps when the input is large enough.
    tm_grid = max(8, ((_cdiv(rows, 8) + 7) // 8) * 8)
    return min(tm, tm_grid)


def _fused_rowwise_kernel(x_ref, w_ref, o_ref, *, inv_c):
    # One original row per tile row (used when C >= 128 or C does not pack into 128 lanes).
    x = x_ref[...].astype(jnp.float32)                      # (tm, C)
    s1 = jnp.sum(x, axis=-1, keepdims=True)
    s2 = jnp.sum(x * x, axis=-1, keepdims=True)
    mu = s1 * inv_c
    var = jnp.maximum(s2 * inv_c - mu * mu, 0.0)            # single-pass variance
    inv = lax.rsqrt(var + _EPS)
    w = w_ref[...].astype(jnp.float32)                      # (1, C)
    # out = x + (x * inv) * w  ==  x * (1 + inv * w)
    o_ref[...] = (x * (inv * w + 1.0)).astype(o_ref.dtype)


def _fused_packed_kernel(x_ref, w_ref, s_ref, o_ref, *, inv_c):
    # Lane-dense layout: k = 128 // C original rows packed per 128-lane row. Per-segment
    # sums come from an MXU matmul with a constant (128,128) block-diagonal ones matrix
    # (each segment's sum is broadcast back across its own C lanes), so the VPU work and
    # the output store are full-width.
    x = x_ref[...].astype(jnp.float32)                      # (tm, k*C)
    s = s_ref[...]                                          # (k*C, k*C) block-diag ones
    s1 = jnp.dot(x, s, preferred_element_type=jnp.float32,
                 precision=lax.Precision.HIGHEST)
    s2 = jnp.dot(x * x, s, preferred_element_type=jnp.float32,
                 precision=lax.Precision.HIGHEST)
    mu = s1 * inv_c
    var = jnp.maximum(s2 * inv_c - mu * mu, 0.0)
    inv = lax.rsqrt(var + _EPS)
    w = w_ref[...].astype(jnp.float32)                      # (1, k*C) = weight tiled k times
    o_ref[...] = (x * (inv * w + 1.0)).astype(o_ref.dtype)


@jax.jit
def shortcut_block(x: jax.Array, weight: jax.Array) -> jax.Array:
    """ShortcutBlock forward: x + BiasFree_LayerNorm(x; weight).  x: (..., C), weight: (C,)."""
    orig_shape = x.shape
    C = orig_shape[-1]
    assert weight.shape == (C,)
    rows = 1
    for d in orig_shape[:-1]:
        rows *= d
    x2 = x.reshape(rows, C)

    vmem_limit = _vmem_limit_bytes()
    compiler_params = pltpu.CompilerParams(
        dimension_semantics=("parallel",),
        vmem_limit_bytes=vmem_limit,
    )

    k = _LANES // C if C < _LANES else 1
    packed = (C < _LANES) and (_LANES % C == 0) and (rows > 0) and (rows % k == 0)

    if packed:
        kc = k * C                                          # == 128 lanes
        rows_p = rows // k
        xp = x2.reshape(rows_p, kc)                         # free row-major reshape
        wp = jnp.tile(weight, k).reshape(1, kc)
        seg = jnp.arange(kc, dtype=jnp.int32) // C
        smat = (seg[:, None] == seg[None, :]).astype(jnp.float32)   # (kc, kc)

        tm = _choose_row_tile(rows_p, kc, vmem_limit)
        grid = (pl.cdiv(rows_p, tm),)
        kernel = functools.partial(_fused_packed_kernel, inv_c=1.0 / C)
        out = pl.pallas_call(
            kernel,
            out_shape=jax.ShapeDtypeStruct((rows_p, kc), x.dtype),
            grid_spec=pltpu.PrefetchScalarGridSpec(
                num_scalar_prefetch=0,
                grid=grid,
                in_specs=[
                    pl.BlockSpec((tm, kc), lambda i: (i, 0)),   # packed row tile of x
                    pl.BlockSpec((1, kc), lambda i: (0, 0)),    # tiled weight, resident
                    pl.BlockSpec((kc, kc), lambda i: (0, 0)),   # block-diag ones, resident
                ],
                out_specs=pl.BlockSpec((tm, kc), lambda i: (i, 0)),
            ),
            compiler_params=compiler_params,
        )(xp, wp, smat)
        return out.reshape(orig_shape)

    # Fallback path: one original row per tile row.
    w2 = weight.reshape(1, C)
    tm = _choose_row_tile(rows, C, vmem_limit)
    grid = (pl.cdiv(rows, tm),)
    kernel = functools.partial(_fused_rowwise_kernel, inv_c=1.0 / C)
    out = pl.pallas_call(
        kernel,
        out_shape=jax.ShapeDtypeStruct((rows, C), x.dtype),
        grid_spec=pltpu.PrefetchScalarGridSpec(
            num_scalar_prefetch=0,
            grid=grid,
            in_specs=[
                pl.BlockSpec((tm, C), lambda i: (i, 0)),
                pl.BlockSpec((1, C), lambda i: (0, 0)),
            ],
            out_specs=pl.BlockSpec((tm, C), lambda i: (i, 0)),
        ),
        compiler_params=compiler_params,
    )(x2, w2)
    return out.reshape(orig_shape)


def _reference(x, weight):
    x32 = x.astype(jnp.float32)
    var = jnp.var(x32, axis=-1, keepdims=True)              # ddof=0 == unbiased=False
    ln = x32 / jnp.sqrt(var + _EPS) * weight.astype(jnp.float32)
    return (x32 + ln).astype(x.dtype)


if __name__ == "__main__":
    key = jax.random.PRNGKey(0)
    kx1, kw1, kx2, kw2, kx3 = jax.random.split(key, 5)

    # 1) LXSFormer-style channels-last tensor, small C -> lane-packed MXU path.
    B, H, W, C = 2, 16, 16, 32
    x1 = jax.random.normal(kx1, (B, H, W, C), dtype=jnp.float32)
    w1 = 1.0 + 0.1 * jax.random.normal(kw1, (C,), dtype=jnp.float32)
    out1 = jax.block_until_ready(shortcut_block(x1, w1))
    assert out1.shape == x1.shape and out1.dtype == x1.dtype
    assert jnp.allclose(out1, _reference(x1, w1), atol=1e-4, rtol=1e-4), "packed path mismatch"

    # 2) Wide channel dim -> row-wise fallback path.
    x2v = jax.random.normal(kx2, (2, 8, 8, 192), dtype=jnp.float32)
    w2v = 1.0 + 0.1 * jax.random.normal(kw2, (192,), dtype=jnp.float32)
    out2 = jax.block_until_ready(shortcut_block(x2v, w2v))
    assert jnp.allclose(out2, _reference(x2v, w2v), atol=1e-4, rtol=1e-4), "rowwise path mismatch"

    # 3) Ragged row count -> exercises the cdiv grid with a masked partial last block.
    x3v = jax.random.normal(kx3, (3, 10, 32), dtype=jnp.float32)
    w3v = jnp.ones((32,), dtype=jnp.float32)
    out3 = jax.block_until_ready(shortcut_block(x3v, w3v))
    assert jnp.allclose(out3, _reference(x3v, w3v), atol=1e-4, rtol=1e-4), "ragged path mismatch"

    print("KERNEL_OK")
</pallas_src>

<mosaic_0001>
module attributes {stable_mosaic.version = 11 : i64} {
  func.func @_fused_packed_kernel(%arg0: i32, %arg1: memref<16x128xf32, #tpu.memory_space<vmem>>, %arg2: memref<1x128xf32, #tpu.memory_space<vmem>>, %arg3: memref<128x128xf32, #tpu.memory_space<vmem>>, %arg4: memref<16x128xf32, #tpu.memory_space<vmem>>) attributes {dimension_semantics = [#tpu.dimension_semantics<parallel>], iteration_bounds = array<i64: 8>, scalar_prefetch = 0 : i64, scratch_operands = 0 : i64, tpu.core_type = #tpu.core_type<tc>, window_params = [{transform_indices = @transform_0, window_bounds = array<i64: 16, 128>}, {pipeline_mode = #tpu.pipeline_mode<synchronous>, transform_indices = @transform_1, window_bounds = array<i64: 1, 128>}, {pipeline_mode = #tpu.pipeline_mode<synchronous>, transform_indices = @transform_2, window_bounds = array<i64: 128, 128>}, {transform_indices = @transform_3, window_bounds = array<i64: 16, 128>}]} {
    %c0 = arith.constant 0 : index
    %c0_0 = arith.constant 0 : index
    %0 = vector.load %arg1[%c0, %c0_0] : memref<16x128xf32, #tpu.memory_space<vmem>>, vector<16x128xf32>
    %c0_1 = arith.constant 0 : index
    %c0_2 = arith.constant 0 : index
    %1 = vector.load %arg3[%c0_1, %c0_2] : memref<128x128xf32, #tpu.memory_space<vmem>>, vector<128x128xf32>
    %cst = arith.constant dense<0.000000e+00> : vector<16x128xf32>
    %2 = tpu.matmul %0, %1, %cst {dimension_numbers = #tpu.dot_dimension_numbers<[1], [0], [0], [1], [0, 0, 1, 1], [], []>, precision = #tpu.contract_precision<fp32>} : vector<16x128xf32>, vector<128x128xf32>, vector<16x128xf32> -> vector<16x128xf32>
    %3 = arith.mulf %0, %0 : vector<16x128xf32>
    %cst_3 = arith.constant dense<0.000000e+00> : vector<16x128xf32>
    %4 = tpu.matmul %3, %1, %cst_3 {dimension_numbers = #tpu.dot_dimension_numbers<[1], [0], [0], [1], [0, 0, 1, 1], [], []>, precision = #tpu.contract_precision<fp32>} : vector<16x128xf32>, vector<128x128xf32>, vector<16x128xf32> -> vector<16x128xf32>
    %cst_4 = arith.constant 3.125000e-02 : f32
    %5 = vector.broadcast %cst_4 : f32 to vector<16x128xf32>
    %6 = arith.mulf %2, %5 : vector<16x128xf32>
    %cst_5 = arith.constant 3.125000e-02 : f32
    %7 = vector.broadcast %cst_5 : f32 to vector<16x128xf32>
    %8 = arith.mulf %4, %7 : vector<16x128xf32>
    %9 = arith.mulf %6, %6 : vector<16x128xf32>
    %10 = arith.subf %8, %9 : vector<16x128xf32>
    %cst_6 = arith.constant 0.000000e+00 : f32
    %11 = vector.broadcast %cst_6 : f32 to vector<16x128xf32>
    %12 = arith.maximumf %10, %11 : vector<16x128xf32>
    %cst_7 = arith.constant 9.99999974E-6 : f32
    %13 = vector.broadcast %cst_7 : f32 to vector<16x128xf32>
    %14 = arith.addf %12, %13 : vector<16x128xf32>
    %15 = math.rsqrt %14 : vector<16x128xf32>
    %c0_8 = arith.constant 0 : index
    %c0_9 = arith.constant 0 : index
    %16 = vector.load %arg2[%c0_8, %c0_9] : memref<1x128xf32, #tpu.memory_space<vmem>>, vector<1x128xf32>
    %17 = vector.broadcast %16 : vector<1x128xf32> to vector<16x128xf32>
    %18 = arith.mulf %15, %17 : vector<16x128xf32>
    %cst_10 = arith.constant 1.000000e+00 : f32
    %19 = vector.broadcast %cst_10 : f32 to vector<16x128xf32>
    %20 = arith.addf %18, %19 : vector<16x128xf32>
    %21 = arith.mulf %0, %20 : vector<16x128xf32>
    %c0_11 = arith.constant 0 : index
    %c0_12 = arith.constant 0 : index
    %22 = vector.load %arg4[%c0_11, %c0_12] : memref<16x128xf32, #tpu.memory_space<vmem>>, vector<16x128xf32>
    tpu.vector_store %arg4[%c0_11, %c0_12], %21 {strides = array<i32>} : memref<16x128xf32, #tpu.memory_space<vmem>>, vector<16x128xf32>,
    return
  }
  func.func @transform_0(%arg0: i32) -> (i32, i32) {
    %c0_i32 = arith.constant 0 : i32
    %c0_i32_0 = arith.constant 0 : i32
    return %arg0, %c0_i32 : i32, i32
  }
  func.func @transform_1(%arg0: i32) -> (i32, i32) {
    %c0_i32 = arith.constant 0 : i32
    %c0_i32_0 = arith.constant 0 : i32
    %c0_i32_1 = arith.constant 0 : i32
    return %c0_i32, %c0_i32_0 : i32, i32
  }
  func.func @transform_2(%arg0: i32) -> (i32, i32) {
    %c0_i32 = arith.constant 0 : i32
    %c0_i32_0 = arith.constant 0 : i32
    %c0_i32_1 = arith.constant 0 : i32
    return %c0_i32, %c0_i32_0 : i32, i32
  }
  func.func @transform_3(%arg0: i32) -> (i32, i32) {
    %c0_i32 = arith.constant 0 : i32
    %c0_i32_0 = arith.constant 0 : i32
    return %arg0, %c0_i32 : i32, i32
  }
}

</mosaic_0001>

<llo_original>
// kernel: tile.8
$region0: #{tile.8}
  #allocation0 [shape = 's32[1]{0}', space=sflag, size = 0x4, scoped, tag = 'scoped memory for tile.8']
  %s0 = inlined_call_operand.vmem [shape: f32[32], index: 0, kind: input, shape index: {}]
  %s1 = inlined_call_operand.vmem [shape: f32[4,32], index: 1, kind: output, shape index: {}]
  // Predicated region
  $region2: #{tile.8} parent=0 // pred_check
    _
  $region3: #{tile.8} parent=0 // pred_check_branch
    %3 = sbr.rel (0) target = $region5
  $region4: #{tile.8} parent=0 // pred_region
    _
  $region5: #{tile.8} parent=0 // pred_fallthru
    _
  %v4 = vld [vmem:[%s0] ss:$0 sm:$0xff]
  %5 = vst [vmem:[%s1] sm:$0xf] %v4

// kernel: tile.9
$region0: #{tile.9}
  %s0 = inlined_call_operand.vmem [shape: f32[4,32], index: 0, kind: input, shape index: {}]
  %s1 = inlined_call_operand.vmem [shape: f32[1,128], index: 1, kind: output, shape index: {}]
  $region1: #{tile.9} parent=0
    #allocation0 [shape = 'u8[4096]{0}', space=vmem, size = 0x1000, scoped, tag = 'scoped mem for output reshape']
    #allocation1 [shape = 'u8[4096]{0}', space=vmem, size = 0x1000, scoped, tag = 'scoped mem for input reshape']
    %s3 = sshllo.u32 0, 4
    %v4 = vld [vmem:[%s0] sm:%s3]
    %5 = vst [vmem:[#allocation1] sm:%s3] %v4
    %v6 = vld [vmem:[#allocation1] sm:$0x1]
    %vm7 = vcmask 261120
    %8 = vst.msk [vmem:[#allocation0] sm:$0x1] %vm7, %v6
    %s9 = scalar_lea.vmem [#allocation1], 3
    %v10 = vld [vmem:[%s9] sm:$0x1]
    %11 = vrot.lane.b32.xlu0 %v10, 96
    %v12 = vpop.permute.xlu0 %11
    %vm13 = vcmask 1048320
    %14 = vst.msk [vmem:[#allocation0] sm:$0x1] %vm13, %v12
    %s15 = scalar_lea.vmem [#allocation1], 2
    %v16 = vld [vmem:[%s15] sm:$0x1]
    %17 = vrot.lane.b32.xlu0 %v16, 64
    %v18 = vpop.permute.xlu0 %17
    %vm19 = vcmask 785920
    %20 = vst.msk [vmem:[#allocation0] sm:$0x1] %vm19, %v18
    %s21 = scalar_lea.vmem [#allocation1], 1
    %v22 = vld [vmem:[%s21] sm:$0x1]
    %23 = vrot.lane.b32.xlu0 %v22, 32
    %v24 = vpop.permute.xlu0 %23
    %vm25 = vcmask 523520
    %26 = vst.msk [vmem:[#allocation0] sm:$0x1] %vm25, %v24
    %s28 = sshllo.u32 0, 1
    %v30 = vld [vmem:[#allocation0] sm:%s28]
    %s31 = sshllo.u32 0, 1
    %32 = vst [vmem:[%s1] sm:%s31] %v30

// kernel: shortcut_block.1
$region0: #{shortcut_block.1}
  #allocation0 [shape = 'u32[]', space=smem, size = 0x4, offset = 0x4, fixed_abs, tag = 'smem constant byte address 0x4 - core index']
  #allocation1 [shape = 'u32[144,128]{1,0:T(1,128)}', space=vmem, size = 0x12000, scoped, tag = 'internal scratch']
  %s0 = inlined_call_operand.vmem [shape: f32[128,128], index: 0, kind: input, shape index: {}]
  %s1 = inlined_call_operand.vmem [shape: f32[1,128], index: 1, kind: input, shape index: {}]
  %s2 = inlined_call_operand.vmem [shape: f32[128,128], index: 2, kind: input, shape index: {}]
  %s3 = inlined_call_operand.vmem [shape: f32[128,128], index: 3, kind: output, shape index: {}]
  %s4 = sld [smem:[#allocation0]]
  $region45: #{shortcut_block.1} parent=0
    _
  %s6 = ssub.s32 1, %s4
  %s7 = scalar_select 0, %s6, %s4
  loop: start=0, step=1, limit=10
  $region2: #{shortcut_block.1} parent=0 // loop_pre_header
    _
  $region3: #{shortcut_block.1} parent=0 // loop_header
    %s9 = sphi 0, %s13
    %p10 = scmp.ge.s32.totalorder %s9, 10
    %s19 = sphi 0, %s21
    %s22 = sphi 0, %s19
    %s23 = sphi 0, %s22
    %s39 = sphi 0, %s23
    %s43 = sphi 0, %s43
    %s45 = sphi 0, %s43
    %s46 = sphi 0, %s45
    %s60 = sphi 0, %s46
    %s64 = sphi 0, %s64
    %s66 = sphi 0, %s64
    %s67 = sphi 0, %s66
    %s81 = sphi 0, %s67
    %s87 = sphi 0, %s89
    %s90 = sphi 0, %s87
    %s91 = sphi 0, %s90
    %s107 = sphi 0, %s91
  $region4: #{shortcut_block.1} parent=0 // loop_header_branch
    %12 = sbr.rel (%p10) target = $region8
  $region5: #{shortcut_block.1} parent=0 // loop_body
    %s14 = ssub.s32 %s9, 1
    %s15 = ssub.s32 %s9, 2
    %s16 = sadd.s32 %s9, 1
    %s17 = ssub.s32 %s9, %s16
    %p18 = scmp.eq.s32.totalorder %s17, 0
    %s20 = sadd.s32 %s19, 1
    %s21 = scalar_select %p18, %s19, %s20
    %p24 = pneg %p18
    %p25 = scmp.eq.s32.totalorder %s9, 7
    %p26 = por %p24, %p25
    %p27 = scmp.ne.s32.totalorder %s19, %s22
    %p28 = scmp.eq.s32.totalorder %s9, 0
    %p29 = por %p27, %p28
    %p30 = scmp.ne.s32.totalorder %s19, %s22
    %p31 = scmp.eq.s32.totalorder %s14, 7
    %p32 = por %p30, %p31
    %p33 = scmp.ne.s32.totalorder %s22, %s23
    %p34 = scmp.eq.s32.totalorder %s14, 0
    %p35 = por %p33, %p34
    %p36 = scmp.ne.s32.totalorder %s22, %s23
    %p37 = scmp.eq.s32.totalorder %s15, 7
    %p38 = por %p36, %p37
    %p40 = scmp.ne.s32.totalorder %s23, %s39
    %p41 = scmp.eq.s32.totalorder %s15, 0
    %p42 = por %p40, %p41
    %s44 = sadd.s32 %s43, 1
    %p47 = scmp.eq.s32.totalorder %s9, 7
    %p48 = scmp.ne.s32.totalorder %s43, %s45
    %p49 = scmp.eq.s32.totalorder %s9, 0
    %p50 = por %p48, %p49
    %p51 = scmp.ne.s32.totalorder %s43, %s45
    %p52 = scmp.eq.s32.totalorder %s14, 7
    %p53 = por %p51, %p52
    %p54 = scmp.ne.s32.totalorder %s45, %s46
    %p55 = scmp.eq.s32.totalorder %s14, 0
    %p56 = por %p54, %p55
    %p57 = scmp.ne.s32.totalorder %s45, %s46
    %p58 = scmp.eq.s32.totalorder %s15, 7
    %p59 = por %p57, %p58
    %p61 = scmp.ne.s32.totalorder %s46, %s60
    %p62 = scmp.eq.s32.totalorder %s15, 0
    %p63 = por %p61, %p62
    %s65 = sadd.s32 %s64, 1
    %p68 = scmp.eq.s32.totalorder %s9, 7
    %p69 = scmp.ne.s32.totalorder %s64, %s66
    %p70 = scmp.eq.s32.totalorder %s9, 0
    %p71 = por %p69, %p70
    %p72 = scmp.ne.s32.totalorder %s64, %s66
    %p73 = scmp.eq.s32.totalorder %s14, 7
    %p74 = por %p72, %p73
    %p75 = scmp.ne.s32.totalorder %s66, %s67
    %p76 = scmp.eq.s32.totalorder %s14, 0
    %p77 = por %p75, %p76
    %p78 = scmp.ne.s32.totalorder %s66, %s67
    %p79 = scmp.eq.s32.totalorder %s15, 7
    %p80 = por %p78, %p79
    %p82 = scmp.ne.s32.totalorder %s67, %s81
    %p83 = scmp.eq.s32.totalorder %s15, 0
    %p84 = por %p82, %p83
    %s85 = ssub.s32 %s9, %s16
    %p86 = scmp.eq.s32.totalorder %s85, 0
    %s88 = sadd.s32 %s87, 1
    %s89 = scalar_select %p86, %s87, %s88
    %p92 = pneg %p86
    %p93 = scmp.eq.s32.totalorder %s9, 7
    %p94 = por %p92, %p93
    %p95 = scmp.ne.s32.totalorder %s87, %s90
    %p96 = scmp.eq.s32.totalorder %s9, 0
    %p97 = por %p95, %p96
    %p98 = scmp.ne.s32.totalorder %s87, %s90
    %p99 = scmp.eq.s32.totalorder %s14, 7
    %p100 = por %p98, %p99
    %p101 = scmp.ne.s32.totalorder %s90, %s91
    %p102 = scmp.eq.s32.totalorder %s14, 0
    %p103 = por %p101, %p102
    %p104 = scmp.ne.s32.totalorder %s90, %s91
    %p105 = scmp.eq.s32.totalorder %s15, 7
    %p106 = por %p104, %p105
    %p108 = scmp.ne.s32.totalorder %s91, %s107
    %p109 = scmp.eq.s32.totalorder %s15, 0
    %p110 = por %p108, %p109
    %p111 = scmp.le.s32.totalorder 1, %s9
    %p112 = scmp.lt.s32.totalorder %s9, 9
    %p113 = pnand %p111, %p112
    %p114 = pneg %p113
    // Predicated region
    $region9: #{shortcut_block.1} parent=5 // pred_check
      _
    $region10: #{shortcut_block.1} parent=5 // pred_check_branch
      %116 = sbr.rel (%p113) target = $region12
    $region11: #{shortcut_block.1} parent=5 // pred_region
      %s117 = ssub.s32 %s9, 1
      // Predicated region
      $region13: #{shortcut_block.1} parent=11 // pred_check
        %p118 = pneg %p56
      $region14: #{shortcut_block.1} parent=11 // pred_check_branch
        %120 = sbr.rel (%p118) target = $region16
      $region15: #{shortcut_block.1} parent=11 // pred_region
        _
      $region16: #{shortcut_block.1} parent=11 // pred_fallthru
        _
      // Predicated region
      $region17: #{shortcut_block.1} parent=11 // pred_check
        %p121 = pneg %p77
      $region18: #{shortcut_block.1} parent=11 // pred_check_branch
        %123 = sbr.rel (%p121) target = $region20
      $region19: #{shortcut_block.1} parent=11 // pred_region
        _
      $region20: #{shortcut_block.1} parent=11 // pred_fallthru
        _
    $region12: #{shortcut_block.1} parent=5 // pred_fallthru
      _
    %p124 = scmp.lt.s32.totalorder %s9, 8
    // Predicated region
    $region21: #{shortcut_block.1} parent=5 // pred_check
      %p125 = pneg %p124
    $region22: #{shortcut_block.1} parent=5 // pred_check_branch
      %127 = sbr.rel (%p125) target = $region24
    $region23: #{shortcut_block.1} parent=5 // pred_region
      // Predicated region
      $region25: #{shortcut_block.1} parent=23 // pred_check
        %p128 = pneg %p29
      $region26: #{shortcut_block.1} parent=23 // pred_check_branch
        %130 = sbr.rel (%p128) target = $region28
      $region27: #{shortcut_block.1} parent=23 // pred_region
        %s131 = smul.u32 2, %s9
        %p132 = scmp.lt.s32.totalorder %s131, 15
        %s133 = scalar_select %p132, %s131, 15
        %s134 = smul.addr %s133, 8
        %s135 = scalar_lea.vmem %s0, %s134
        %s136 = smul.u32 2, %s9
      $region28: #{shortcut_block.1} parent=23 // pred_fallthru
        _
    $region24: #{shortcut_block.1} parent=5 // pred_fallthru
      _
    %p137 = scmp.le.s32.totalorder 1, %s9
    %p138 = scmp.lt.s32.totalorder %s9, 9
    %p139 = pnand %p137, %p138
    %p140 = pneg %p139
    // Predicated region
    $region29: #{shortcut_block.1} parent=5 // pred_check
      _
    $region30: #{shortcut_block.1} parent=5 // pred_check_branch
      %142 = sbr.rel (%p139) target = $region32
    $region31: #{shortcut_block.1} parent=5 // pred_region
      %s143 = ssub.s32 %s9, 1
      %s144 = smul.u32 2, %s14
      %p145 = scmp.lt.s32.totalorder %s144, 15
      %s146 = scalar_select %p145, %s144, 15
      %s147 = smul.addr %s146, 8
      %s148 = scalar_lea.vmem %s0, %s147
      %p149 = pneg %p35
      %p150 = pneg %p32
      %p151 = pneg %p56
      %p152 = pneg %p53
      %p153 = pneg %p77
      %p154 = pneg %p74
      %p155 = pneg %p103
      %p156 = pneg %p100
      %s157 = smul.u32 2, %s14
      %p158 = scmp.lt.s32.totalorder %s157, 15
      %s159 = scalar_select %p158, %s157, 15
      %s160 = smul.addr %s159, 8
      %s161 = scalar_lea.vmem %s3, %s160
      %s162 = smul.u32 2, %s14
      %p163 = scmp.lt.s32.totalorder %s162, 15
      %s164 = scalar_select %p163, %s162, 15
      %s165 = smul.addr %s164, 8
      %s166 = scalar_lea.vmem %s0, %s165
      %s167 = smul.u32 2, %s14
      %s168 = smul.u32 2, %s14
      %p169 = scmp.lt.s32.totalorder %s168, 15
      %s170 = scalar_select %p169, %s168, 15
      %s171 = smul.addr %s170, 8
      %s172 = scalar_lea.vmem %s3, %s171
      %s173 = smul.u32 2, %s14
      %v174 = vld [vmem:[%s166] sm:$0xff]
      %v175 = vld [vmem:[%s166 + $0x8] sm:$0xff]
      %v176 = vld [vmem:[%s2] sm:$0xff]
      %v177 = vld [vmem:[%s2 + $0x8] sm:$0xff]
      %v178 = vld [vmem:[%s2 + $0x10] sm:$0xff]
      %v179 = vld [vmem:[%s2 + $0x18] sm:$0xff]
      %v180 = vld [vmem:[%s2 + $0x20] sm:$0xff]
      %v181 = vld [vmem:[%s2 + $0x28] sm:$0xff]
      %v182 = vld [vmem:[%s2 + $0x30] sm:$0xff]
      %v183 = vld [vmem:[%s2 + $0x38] sm:$0xff]
      %v184 = vld [vmem:[%s2 + $0x40] sm:$0xff]
      %v185 = vld [vmem:[%s2 + $0x48] sm:$0xff]
      %v186 = vld [vmem:[%s2 + $0x50] sm:$0xff]
      %v187 = vld [vmem:[%s2 + $0x58] sm:$0xff]
      %v188 = vld [vmem:[%s2 + $0x60] sm:$0xff]
      %v189 = vld [vmem:[%s2 + $0x68] sm:$0xff]
      %v190 = vld [vmem:[%s2 + $0x70] sm:$0xff]
      %v191 = vld [vmem:[%s2 + $0x78] sm:$0xff]
      %192 = vmatprep.subr.mxu0 0.0
      %v193 = vand.u32 %v176, 4294901760
      %194 = vmatpush1.msra.mxu0 %v193
      %195 = vmatprep.subr.mxu0 0.0
      %v196 = vand.u32 %v177, 4294901760
      %197 = vmatpush1.msra.mxu0 %v196
      %198 = vmatprep.subr.mxu0 0.0
      %v199 = vand.u32 %v178, 4294901760
      %200 = vmatpush1.msra.mxu0 %v199
      %201 = vmatprep.subr.mxu0 0.0
      %v202 = vand.u32 %v179, 4294901760
      %203 = vmatpush1.msra.mxu0 %v202
      %204 = vmatprep.subr.mxu0 0.0
      %v205 = vand.u32 %v180, 4294901760
      %206 = vmatpush1.msra.mxu0 %v205
      %207 = vmatprep.subr.mxu0 0.0
      %v208 = vand.u32 %v181, 4294901760
      %209 = vmatpush1.msra.mxu0 %v208
      %210 = vmatprep.subr.mxu0 0.0
      %v211 = vand.u32 %v182, 4294901760
      %212 = vmatpush1.msra.mxu0 %v211
      %213 = vmatprep.subr.mxu0 0.0
      %v214 = vand.u32 %v183, 4294901760
      %215 = vmatpush1.msra.mxu0 %v214
      %216 = vmatprep.subr.mxu0 0.0
      %v217 = vand.u32 %v184, 4294901760
      %218 = vmatpush1.msra.mxu0 %v217
      %219 = vmatprep.subr.mxu0 0.0
      %v220 = vand.u32 %v185, 4294901760
      %221 = vmatpush1.msra.mxu0 %v220
      %222 = vmatprep.subr.mxu0 0.0
      %v223 = vand.u32 %v186, 4294901760
      %224 = vmatpush1.msra.mxu0 %v223
      %225 = vmatprep.subr.mxu0 0.0
      %v226 = vand.u32 %v187, 4294901760
      %227 = vmatpush1.msra.mxu0 %v226
      %228 = vmatprep.subr.mxu0 0.0
      %v229 = vand.u32 %v188, 4294901760
      %230 = vmatpush1.msra.mxu0 %v229
      %231 = vmatprep.subr.mxu0 0.0
      %v232 = vand.u32 %v189, 4294901760
      %233 = vmatpush1.msra.mxu0 %v232
      %234 = vmatprep.subr.mxu0 0.0
      %v235 = vand.u32 %v190, 4294901760
      %236 = vmatpush1.msra.mxu0 %v235
      %237 = vmatprep.subr.mxu0 0.0
      %v238 = vand.u32 %v191, 4294901760
      %239 = vmatpush1.msra.mxu0 %v238
      %240 = vmatprep.subr.mxu0 0.0
      %241 = vmatpush1.msra.mxu0 0.0
      %242 = vmatprep.subr.mxu0 0.0
      %243 = vmatpush1.msra.mxu0 0.0
      %244 = vmatprep.subr.mxu0 0.0
      %245 = vmatpush1.msra.mxu0 0.0
      %246 = vmatprep.subr.mxu0 0.0
      %247 = vmatpush1.msra.mxu0 0.0
      %248 = vmatprep.subr.mxu0 0.0
      %249 = vmatpush1.msra.mxu0 0.0
      %250 = vmatprep.subr.mxu0 0.0
      %251 = vmatpush1.msra.mxu0 0.0
      %252 = vmatprep.subr.mxu0 0.0
      %253 = vmatpush1.msra.mxu0 0.0
      %254 = vmatprep.subr.mxu0 0.0
      %255 = vmatpush1.msra.mxu0 0.0
      %256 = vmatprep.subr.mxu0 0.0
      %257 = vmatpush1.msra.mxu0 0.0
      %258 = vmatprep.subr.mxu0 0.0
      %259 = vmatpush1.msra.mxu0 0.0
      %260 = vmatprep.subr.mxu0 0.0
      %261 = vmatpush1.msra.mxu0 0.0
      %262 = vmatprep.subr.mxu0 0.0
      %263 = vmatpush1.msra.mxu0 0.0
      %264 = vmatprep.subr.mxu0 0.0
      %265 = vmatpush1.msra.mxu0 0.0
      %266 = vmatprep.subr.mxu0 0.0
      %267 = vmatpush1.msra.mxu0 0.0
      %268 = vmatprep.subr.mxu0 0.0
      %269 = vmatpush1.msra.mxu0 0.0
      %270 = vmatprep.subr.mxu0 0.0
      %271 = vmatpush1.msra.mxu0 0.0
      %272 = vmatprep.mubr.f32.mxu0 0.0
      %v273 = vand.u32 %v174, 4294901760
      %v274 = vsub.f32 %v174, %v273
      %v275 = vand.u32 %v274, 4294901760
      %v276 = vsub.f32 %v274, %v275
      %v277 = vand.u32 %v276, 4294901760
      %278 = vmatmul.mubr.f32.gmra.mrb[0].mxu0 %v277
      %v279 = vpop.f32.mrb[0].mxu0
      %v280 = vadd.f32 0.0, %v279
      %v281 = vpop.f32.mrb[0].mxu0
      %282 = vmatprep.mubr.f32.mxu0 0.0
      %v283 = vand.u32 %v175, 4294901760
      %v284 = vsub.f32 %v175, %v283
      %v285 = vand.u32 %v284, 4294901760
      %v286 = vsub.f32 %v284, %v285
      %v287 = vand.u32 %v286, 4294901760
      %288 = vmatmul.mubr.f32.gmra.mrb[0].mxu0 %v287
      %v289 = vpop.f32.mrb[0].mxu0
      %v290 = vadd.f32 0.0, %v289
      %v291 = vpop.f32.mrb[0].mxu0
      %292 = vdwg.mxu0
      %293 = vmatprep.subr.mxu0 0.0
      %v294 = vand.u32 %v176, 4294901760
      %v295 = vsub.f32 %v176, %v294
      %v296 = vand.u32 %v295, 4294901760
      %v297 = vsub.f32 %v295, %v296
      %v298 = vand.u32 %v297, 4294901760
      %299 = vmatpush1.msra.mxu0 %v298
      %300 = vmatprep.subr.mxu0 0.0
      %v301 = vand.u32 %v177, 4294901760
      %v302 = vsub.f32 %v177, %v301
      %v303 = vand.u32 %v302, 4294901760
      %v304 = vsub.f32 %v302, %v303
      %v305 = vand.u32 %v304, 4294901760
      %306 = vmatpush1.msra.mxu0 %v305
      %307 = vmatprep.subr.mxu0 0.0
      %v308 = vand.u32 %v178, 4294901760
      %v309 = vsub.f32 %v178, %v308
      %v310 = vand.u32 %v309, 4294901760
      %v311 = vsub.f32 %v309, %v310
      %v312 = vand.u32 %v311, 4294901760
      %313 = vmatpush1.msra.mxu0 %v312
      %314 = vmatprep.subr.mxu0 0.0
      %v315 = vand.u32 %v179, 4294901760
      %v316 = vsub.f32 %v179, %v315
      %v317 = vand.u32 %v316, 4294901760
      %v318 = vsub.f32 %v316, %v317
      %v319 = vand.u32 %v318, 4294901760
      %320 = vmatpush1.msra.mxu0 %v319
      %321 = vmatprep.subr.mxu0 0.0
      %v322 = vand.u32 %v180, 4294901760
      %v323 = vsub.f32 %v180, %v322
      %v324 = vand.u32 %v323, 4294901760
      %v325 = vsub.f32 %v323, %v324
      %v326 = vand.u32 %v325, 4294901760
      %327 = vmatpush1.msra.mxu0 %v326
      %328 = vmatprep.subr.mxu0 0.0
      %v329 = vand.u32 %v181, 4294901760
      %v330 = vsub.f32 %v181, %v329
      %v331 = vand.u32 %v330, 4294901760
      %v332 = vsub.f32 %v330, %v331
      %v333 = vand.u32 %v332, 4294901760
      %334 = vmatpush1.msra.mxu0 %v333
      %335 = vmatprep.subr.mxu0 0.0
      %v336 = vand.u32 %v182, 4294901760
      %v337 = vsub.f32 %v182, %v336
      %v338 = vand.u32 %v337, 4294901760
      %v339 = vsub.f32 %v337, %v338
      %v340 = vand.u32 %v339, 4294901760
      %341 = vmatpush1.msra.mxu0 %v340
      %342 = vmatprep.subr.mxu0 0.0
      %v343 = vand.u32 %v183, 4294901760
      %v344 = vsub.f32 %v183, %v343
      %v345 = vand.u32 %v344, 4294901760
      %v346 = vsub.f32 %v344, %v345
      %v347 = vand.u32 %v346, 4294901760
      %348 = vmatpush1.msra.mxu0 %v347
      %349 = vmatprep.subr.mxu0 0.0
      %v350 = vand.u32 %v184, 4294901760
      %v351 = vsub.f32 %v184, %v350
      %v352 = vand.u32 %v351, 4294901760
      %v353 = vsub.f32 %v351, %v352
      %v354 = vand.u32 %v353, 4294901760
      %355 = vmatpush1.msra.mxu0 %v354
      %356 = vmatprep.subr.mxu0 0.0
      %v357 = vand.u32 %v185, 4294901760
      %v358 = vsub.f32 %v185, %v357
      %v359 = vand.u32 %v358, 4294901760
      %v360 = vsub.f32 %v358, %v359
      %v361 = vand.u32 %v360, 4294901760
      %362 = vmatpush1.msra.mxu0 %v361
      %363 = vmatprep.subr.mxu0 0.0
      %v364 = vand.u32 %v186, 4294901760
      %v365 = vsub.f32 %v186, %v364
      %v366 = vand.u32 %v365, 4294901760
      %v367 = vsub.f32 %v365, %v366
      %v368 = vand.u32 %v367, 4294901760
      %369 = vmatpush1.msra.mxu0 %v368
      %370 = vmatprep.subr.mxu0 0.0
      %v371 = vand.u32 %v187, 4294901760
      %v372 = vsub.f32 %v187, %v371
      %v373 = vand.u32 %v372, 4294901760
      %v374 = vsub.f32 %v372, %v373
      %v375 = vand.u32 %v374, 4294901760
      %376 = vmatpush1.msra.mxu0 %v375
      %377 = vmatprep.subr.mxu0 0.0
      %v378 = vand.u32 %v188, 4294901760
      %v379 = vsub.f32 %v188, %v378
      %v380 = vand.u32 %v379, 4294901760
      %v381 = vsub.f32 %v379, %v380
      %v382 = vand.u32 %v381, 4294901760
      %383 = vmatpush1.msra.mxu0 %v382
      %384 = vmatprep.subr.mxu0 0.0
      %v385 = vand.u32 %v189, 4294901760
      %v386 = vsub.f32 %v189, %v385
      %v387 = vand.u32 %v386, 4294901760
      %v388 = vsub.f32 %v386, %v387
      %v389 = vand.u32 %v388, 4294901760
      %390 = vmatpush1.msra.mxu0 %v389
      %391 = vmatprep.subr.mxu0 0.0
      %v392 = vand.u32 %v190, 4294901760
      %v393 = vsub.f32 %v190, %v392
      %v394 = vand.u32 %v393, 4294901760
      %v395 = vsub.f32 %v393, %v394
      %v396 = vand.u32 %v395, 4294901760
      %397 = vmatpush1.msra.mxu0 %v396
      %398 = vmatprep.subr.mxu0 0.0
      %v399 = vand.u32 %v191, 4294901760
      %v400 = vsub.f32 %v191, %v399
      %v401 = vand.u32 %v400, 4294901760
      %v402 = vsub.f32 %v400, %v401
      %v403 = vand.u32 %v402, 4294901760
      %404 = vmatpush1.msra.mxu0 %v403
      %405 = vmatprep.subr.mxu0 0.0
      %406 = vmatpush1.msra.mxu0 0.0
      %407 = vmatprep.subr.mxu0 0.0
      %408 = vmatpush1.msra.mxu0 0.0
      %409 = vmatprep.subr.mxu0 0.0
      %410 = vmatpush1.msra.mxu0 0.0
      %411 = vmatprep.subr.mxu0 0.0
      %412 = vmatpush1.msra.mxu0 0.0
      %413 = vmatprep.subr.mxu0 0.0
      %414 = vmatpush1.msra.mxu0 0.0
      %415 = vmatprep.subr.mxu0 0.0
      %416 = vmatpush1.msra.mxu0 0.0
      %417 = vmatprep.subr.mxu0 0.0
      %418 = vmatpush1.msra.mxu0 0.0
      %419 = vmatprep.subr.mxu0 0.0
      %420 = vmatpush1.msra.mxu0 0.0
      %421 = vmatprep.subr.mxu0 0.0
      %422 = vmatpush1.msra.mxu0 0.0
      %423 = vmatprep.subr.mxu0 0.0
      %424 = vmatpush1.msra.mxu0 0.0
      %425 = vmatprep.subr.mxu0 0.0
      %426 = vmatpush1.msra.mxu0 0.0
      %427 = vmatprep.subr.mxu0 0.0
      %428 = vmatpush1.msra.mxu0 0.0
      %429 = vmatprep.subr.mxu0 0.0
      %430 = vmatpush1.msra.mxu0 0.0
      %431 = vmatprep.subr.mxu0 0.0
      %432 = vmatpush1.msra.mxu0 0.0
      %433 = vmatprep.subr.mxu0 0.0
      %434 = vmatpush1.msra.mxu0 0.0
      %435 = vmatprep.subr.mxu0 0.0
      %436 = vmatpush1.msra.mxu0 0.0
      %437 = vmatprep.mubr.f32.mxu0 0.0
      %v438 = vand.u32 %v174, 4294901760
      %439 = vmatmul.mubr.f32.gmra.mrb[0].mxu0 %v438
      %v440 = vpop.f32.mrb[0].mxu0
      %v441 = vadd.f32 %v280, %v440
      %v442 = vpop.f32.mrb[0].mxu0
      %443 = vmatprep.mubr.f32.mxu0 0.0
      %v444 = vand.u32 %v175, 4294901760
      %445 = vmatmul.mubr.f32.gmra.mrb[0].mxu0 %v444
      %v446 = vpop.f32.mrb[0].mxu0
      %v447 = vadd.f32 %v290, %v446
      %v448 = vpop.f32.mrb[0].mxu0
      %449 = vdwg.mxu0
      %450 = vmatprep.subr.mxu0 0.0
      %v451 = vand.u32 %v176, 4294901760
      %v452 = vsub.f32 %v176, %v451
      %453 = vmatpush1.msra.mxu0 %v452
      %454 = vmatprep.subr.mxu0 0.0
      %v455 = vand.u32 %v177, 4294901760
      %v456 = vsub.f32 %v177, %v455
      %457 = vmatpush1.msra.mxu0 %v456
      %458 = vmatprep.subr.mxu0 0.0
      %v459 = vand.u32 %v178, 4294901760
      %v460 = vsub.f32 %v178, %v459
      %461 = vmatpush1.msra.mxu0 %v460
      %462 = vmatprep.subr.mxu0 0.0
      %v463 = vand.u32 %v179, 4294901760
      %v464 = vsub.f32 %v179, %v463
      %465 = vmatpush1.msra.mxu0 %v464
      %466 = vmatprep.subr.mxu0 0.0
      %v467 = vand.u32 %v180, 4294901760
      %v468 = vsub.f32 %v180, %v467
      %469 = vmatpush1.msra.mxu0 %v468
      %470 = vmatprep.subr.mxu0 0.0
      %v471 = vand.u32 %v181, 4294901760
      %v472 = vsub.f32 %v181, %v471
      %473 = vmatpush1.msra.mxu0 %v472
      %474 = vmatprep.subr.mxu0 0.0
      %v475 = vand.u32 %v182, 4294901760
      %v476 = vsub.f32 %v182, %v475
      %477 = vmatpush1.msra.mxu0 %v476
      %478 = vmatprep.subr.mxu0 0.0
      %v479 = vand.u32 %v183, 4294901760
      %v480 = vsub.f32 %v183, %v479
      %481 = vmatpush1.msra.mxu0 %v480
      %482 = vmatprep.subr.mxu0 0.0
      %v483 = vand.u32 %v184, 4294901760
      %v484 = vsub.f32 %v184, %v483
      %485 = vmatpush1.msra.mxu0 %v484
      %486 = vmatprep.subr.mxu0 0.0
      %v487 = vand.u32 %v185, 4294901760
      %v488 = vsub.f32 %v185, %v487
      %489 = vmatpush1.msra.mxu0 %v488
      %490 = vmatprep.subr.mxu0 0.0
      %v491 = vand.u32 %v186, 4294901760
      %v492 = vsub.f32 %v186, %v491
      %493 = vmatpush1.msra.mxu0 %v492
      %494 = vmatprep.subr.mxu0 0.0
      %v495 = vand.u32 %v187, 4294901760
      %v496 = vsub.f32 %v187, %v495
      %497 = vmatpush1.msra.mxu0 %v496
      %498 = vmatprep.subr.mxu0 0.0
      %v499 = vand.u32 %v188, 4294901760
      %v500 = vsub.f32 %v188, %v499
      %501 = vmatpush1.msra.mxu0 %v500
      %502 = vmatprep.subr.mxu0 0.0
      %v503 = vand.u32 %v189, 4294901760
      %v504 = vsub.f32 %v189, %v503
      %505 = vmatpush1.msra.mxu0 %v504
      %506 = vmatprep.subr.mxu0 0.0
      %v507 = vand.u32 %v190, 4294901760
      %v508 = vsub.f32 %v190, %v507
      %509 = vmatpush1.msra.mxu0 %v508
      %510 = vmatprep.subr.mxu0 0.0
      %v511 = vand.u32 %v191, 4294901760
      %v512 = vsub.f32 %v191, %v511
      %513 = vmatpush1.msra.mxu0 %v512
      %514 = vmatprep.subr.mxu0 0.0
      %515 = vmatpush1.msra.mxu0 0.0
      %516 = vmatprep.subr.mxu0 0.0
      %517 = vmatpush1.msra.mxu0 0.0
      %518 = vmatprep.subr.mxu0 0.0
      %519 = vmatpush1.msra.mxu0 0.0
      %520 = vmatprep.subr.mxu0 0.0
      %521 = vmatpush1.msra.mxu0 0.0
      %522 = vmatprep.subr.mxu0 0.0
      %523 = vmatpush1.msra.mxu0 0.0
      %524 = vmatprep.subr.mxu0 0.0
      %525 = vmatpush1.msra.mxu0 0.0
      %526 = vmatprep.subr.mxu0 0.0
      %527 = vmatpush1.msra.mxu0 0.0
      %528 = vmatprep.subr.mxu0 0.0
      %529 = vmatpush1.msra.mxu0 0.0
      %530 = vmatprep.subr.mxu0 0.0
      %531 = vmatpush1.msra.mxu0 0.0
      %532 = vmatprep.subr.mxu0 0.0
      %533 = vmatpush1.msra.mxu0 0.0
      %534 = vmatprep.subr.mxu0 0.0
      %535 = vmatpush1.msra.mxu0 0.0
      %536 = vmatprep.subr.mxu0 0.0
      %537 = vmatpush1.msra.mxu0 0.0
      %538 = vmatprep.subr.mxu0 0.0
      %539 = vmatpush1.msra.mxu0 0.0
      %540 = vmatprep.subr.mxu0 0.0
      %541 = vmatpush1.msra.mxu0 0.0
      %542 = vmatprep.subr.mxu0 0.0
      %543 = vmatpush1.msra.mxu0 0.0
      %544 = vmatprep.subr.mxu0 0.0
      %545 = vmatpush1.msra.mxu0 0.0
      %546 = vmatprep.mubr.f32.mxu0 0.0
      %v547 = vand.u32 %v174, 4294901760
      %v548 = vsub.f32 %v174, %v547
      %549 = vmatmul.mubr.f32.gmra.mrb[0].mxu0 %v548
      %v550 = vpop.f32.mrb[0].mxu0
      %v551 = vadd.f32 %v441, %v550
      %v552 = vpop.f32.mrb[0].mxu0
      %553 = vmatprep.mubr.f32.mxu0 0.0
      %v554 = vand.u32 %v175, 4294901760
      %v555 = vsub.f32 %v175, %v554
      %556 = vmatmul.mubr.f32.gmra.mrb[0].mxu0 %v555
      %v557 = vpop.f32.mrb[0].mxu0
      %v558 = vadd.f32 %v447, %v557
      %v559 = vpop.f32.mrb[0].mxu0
      %560 = vdwg.mxu0
      %561 = vmatprep.subr.mxu0 0.0
      %v562 = vand.u32 %v176, 4294901760
      %563 = vmatpush1.msra.mxu0 %v562
      %564 = vmatprep.subr.mxu0 0.0
      %v565 = vand.u32 %v177, 4294901760
      %566 = vmatpush1.msra.mxu0 %v565
      %567 = vmatprep.subr.mxu0 0.0
      %v568 = vand.u32 %v178, 4294901760
      %569 = vmatpush1.msra.mxu0 %v568
      %570 = vmatprep.subr.mxu0 0.0
      %v571 = vand.u32 %v179, 4294901760
      %572 = vmatpush1.msra.mxu0 %v571
      %573 = vmatprep.subr.mxu0 0.0
      %v574 = vand.u32 %v180, 4294901760
      %575 = vmatpush1.msra.mxu0 %v574
      %576 = vmatprep.subr.mxu0 0.0
      %v577 = vand.u32 %v181, 4294901760
      %578 = vmatpush1.msra.mxu0 %v577
      %579 = vmatprep.subr.mxu0 0.0
      %v580 = vand.u32 %v182, 4294901760
      %581 = vmatpush1.msra.mxu0 %v580
      %582 = vmatprep.subr.mxu0 0.0
      %v583 = vand.u32 %v183, 4294901760
      %584 = vmatpush1.msra.mxu0 %v583
      %585 = vmatprep.subr.mxu0 0.0
      %v586 = vand.u32 %v184, 4294901760
      %587 = vmatpush1.msra.mxu0 %v586
      %588 = vmatprep.subr.mxu0 0.0
      %v589 = vand.u32 %v185, 4294901760
      %590 = vmatpush1.msra.mxu0 %v589
      %591 = vmatprep.subr.mxu0 0.0
      %v592 = vand.u32 %v186, 4294901760
      %593 = vmatpush1.msra.mxu0 %v592
      %594 = vmatprep.subr.mxu0 0.0
      %v595 = vand.u32 %v187, 4294901760
      %596 = vmatpush1.msra.mxu0 %v595
      %597 = vmatprep.subr.mxu0 0.0
      %v598 = vand.u32 %v188, 4294901760
      %599 = vmatpush1.msra.mxu0 %v598
      %600 = vmatprep.subr.mxu0 0.0
      %v601 = vand.u32 %v189, 4294901760
      %602 = vmatpush1.msra.mxu0 %v601
      %603 = vmatprep.subr.mxu0 0.0
      %v604 = vand.u32 %v190, 4294901760
      %605 = vmatpush1.msra.mxu0 %v604
      %606 = vmatprep.subr.mxu0 0.0
      %v607 = vand.u32 %v191, 4294901760
      %608 = vmatpush1.msra.mxu0 %v607
      %609 = vmatprep.subr.mxu0 0.0
      %610 = vmatpush1.msra.mxu0 0.0
      %611 = vmatprep.subr.mxu0 0.0
      %612 = vmatpush1.msra.mxu0 0.0
      %613 = vmatprep.subr.mxu0 0.0
      %614 = vmatpush1.msra.mxu0 0.0
      %615 = vmatprep.subr.mxu0 0.0
      %616 = vmatpush1.msra.mxu0 0.0
      %617 = vmatprep.subr.mxu0 0.0
      %618 = vmatpush1.msra.mxu0 0.0
      %619 = vmatprep.subr.mxu0 0.0
      %620 = vmatpush1.msra.mxu0 0.0
      %621 = vmatprep.subr.mxu0 0.0
      %622 = vmatpush1.msra.mxu0 0.0
      %623 = vmatprep.subr.mxu0 0.0
      %624 = vmatpush1.msra.mxu0 0.0
      %625 = vmatprep.subr.mxu0 0.0
      %626 = vmatpush1.msra.mxu0 0.0
      %627 = vmatprep.subr.mxu0 0.0
      %628 = vmatpush1.msra.mxu0 0.0
      %629 = vmatprep.subr.mxu0 0.0
      %630 = vmatpush1.msra.mxu0 0.0
      %631 = vmatprep.subr.mxu0 0.0
      %632 = vmatpush1.msra.mxu0 0.0
      %633 = vmatprep.subr.mxu0 0.0
      %634 = vmatpush1.msra.mxu0 0.0
      %635 = vmatprep.subr.mxu0 0.0
      %636 = vmatpush1.msra.mxu0 0.0
      %637 = vmatprep.subr.mxu0 0.0
      %638 = vmatpush1.msra.mxu0 0.0
      %639 = vmatprep.subr.mxu0 0.0
      %640 = vmatpush1.msra.mxu0 0.0
      %641 = vmatprep.mubr.f32.mxu0 0.0
      %v642 = vand.u32 %v174, 4294901760
      %v643 = vsub.f32 %v174, %v642
      %v644 = vand.u32 %v643, 4294901760
      %645 = vmatmul.mubr.f32.gmra.mrb[0].mxu0 %v644
      %v646 = vpop.f32.mrb[0].mxu0
      %v647 = vadd.f32 %v551, %v646
      %v648 = vpop.f32.mrb[0].mxu0
      %649 = vmatprep.mubr.f32.mxu0 0.0
      %v650 = vand.u32 %v175, 4294901760
      %v651 = vsub.f32 %v175, %v650
      %v652 = vand.u32 %v651, 4294901760
      %653 = vmatmul.mubr.f32.gmra.mrb[0].mxu0 %v652
      %v654 = vpop.f32.mrb[0].mxu0
      %v655 = vadd.f32 %v558, %v654
      %v656 = vpop.f32.mrb[0].mxu0
      %657 = vdwg.mxu0
      %658 = vmatprep.subr.mxu0 0.0
      %v659 = vand.u32 %v176, 4294901760
      %v660 = vsub.f32 %v176, %v659
      %v661 = vand.u32 %v660, 4294901760
      %662 = vmatpush1.msra.mxu0 %v661
      %663 = vmatprep.subr.mxu0 0.0
      %v664 = vand.u32 %v177, 4294901760
      %v665 = vsub.f32 %v177, %v664
      %v666 = vand.u32 %v665, 4294901760
      %667 = vmatpush1.msra.mxu0 %v666
      %668 = vmatprep.subr.mxu0 0.0
      %v669 = vand.u32 %v178, 4294901760
      %v670 = vsub.f32 %v178, %v669
      %v671 = vand.u32 %v670, 4294901760
      %672 = vmatpush1.msra.mxu0 %v671
      %673 = vmatprep.subr.mxu0 0.0
      %v674 = vand.u32 %v179, 4294901760
      %v675 = vsub.f32 %v179, %v674
      %v676 = vand.u32 %v675, 4294901760
      %677 = vmatpush1.msra.mxu0 %v676
      %678 = vmatprep.subr.mxu0 0.0
      %v679 = vand.u32 %v180, 4294901760
      %v680 = vsub.f32 %v180, %v679
      %v681 = vand.u32 %v680, 4294901760
      %682 = vmatpush1.msra.mxu0 %v681
      %683 = vmatprep.subr.mxu0 0.0
      %v684 = vand.u32 %v181, 4294901760
      %v685 = vsub.f32 %v181, %v684
      %v686 = vand.u32 %v685, 4294901760
      %687 = vmatpush1.msra.mxu0 %v686
      %688 = vmatprep.subr.mxu0 0.0
      %v689 = vand.u32 %v182, 4294901760
      %v690 = vsub.f32 %v182, %v689
      %v691 = vand.u32 %v690, 4294901760
      %692 = vmatpush1.msra.mxu0 %v691
      %693 = vmatprep.subr.mxu0 0.0
      %v694 = vand.u32 %v183, 4294901760
      %v695 = vsub.f32 %v183, %v694
      %v696 = vand.u32 %v695, 4294901760
      %697 = vmatpush1.msra.mxu0 %v696
      %698 = vmatprep.subr.mxu0 0.0
      %v699 = vand.u32 %v184, 4294901760
      %v700 = vsub.f32 %v184, %v699
      %v701 = vand.u32 %v700, 4294901760
      %702 = vmatpush1.msra.mxu0 %v701
      %703 = vmatprep.subr.mxu0 0.0
      %v704 = vand.u32 %v185, 4294901760
      %v705 = vsub.f32 %v185, %v704
      %v706 = vand.u32 %v705, 4294901760
      %707 = vmatpush1.msra.mxu0 %v706
      %708 = vmatprep.subr.mxu0 0.0
      %v709 = vand.u32 %v186, 4294901760
      %v710 = vsub.f32 %v186, %v709
      %v711 = vand.u32 %v710, 4294901760
      %712 = vmatpush1.msra.mxu0 %v711
      %713 = vmatprep.subr.mxu0 0.0
      %v714 = vand.u32 %v187, 4294901760
      %v715 = vsub.f32 %v187, %v714
      %v716 = vand.u32 %v715, 4294901760
      %717 = vmatpush1.msra.mxu0 %v716
      %718 = vmatprep.subr.mxu0 0.0
      %v719 = vand.u32 %v188, 4294901760
      %v720 = vsub.f32 %v188, %v719
      %v721 = vand.u32 %v720, 4294901760
      %722 = vmatpush1.msra.mxu0 %v721
      %723 = vmatprep.subr.mxu0 0.0
      %v724 = vand.u32 %v189, 4294901760
      %v725 = vsub.f32 %v189, %v724
      %v726 = vand.u32 %v725, 4294901760
      %727 = vmatpush1.msra.mxu0 %v726
      %728 = vmatprep.subr.mxu0 0.0
      %v729 = vand.u32 %v190, 4294901760
      %v730 = vsub.f32 %v190, %v729
      %v731 = vand.u32 %v730, 4294901760
      %732 = vmatpush1.msra.mxu0 %v731
      %733 = vmatprep.subr.mxu0 0.0
      %v734 = vand.u32 %v191, 4294901760
      %v735 = vsub.f32 %v191, %v734
      %v736 = vand.u32 %v735, 4294901760
      %737 = vmatpush1.msra.mxu0 %v736
      %738 = vmatprep.subr.mxu0 0.0
      %739 = vmatpush1.msra.mxu0 0.0
      %740 = vmatprep.subr.mxu0 0.0
      %741 = vmatpush1.msra.mxu0 0.0
      %742 = vmatprep.subr.mxu0 0.0
      %743 = vmatpush1.msra.mxu0 0.0
      %744 = vmatprep.subr.mxu0 0.0
      %745 = vmatpush1.msra.mxu0 0.0
      %746 = vmatprep.subr.mxu0 0.0
      %747 = vmatpush1.msra.mxu0 0.0
      %748 = vmatprep.subr.mxu0 0.0
      %749 = vmatpush1.msra.mxu0 0.0
      %750 = vmatprep.subr.mxu0 0.0
      %751 = vmatpush1.msra.mxu0 0.0
      %752 = vmatprep.subr.mxu0 0.0
      %753 = vmatpush1.msra.mxu0 0.0
      %754 = vmatprep.subr.mxu0 0.0
      %755 = vmatpush1.msra.mxu0 0.0
      %756 = vmatprep.subr.mxu0 0.0
      %757 = vmatpush1.msra.mxu0 0.0
      %758 = vmatprep.subr.mxu0 0.0
      %759 = vmatpush1.msra.mxu0 0.0
      %760 = vmatprep.subr.mxu0 0.0
      %761 = vmatpush1.msra.mxu0 0.0
      %762 = vmatprep.subr.mxu0 0.0
      %763 = vmatpush1.msra.mxu0 0.0
      %764 = vmatprep.subr.mxu0 0.0
      %765 = vmatpush1.msra.mxu0 0.0
      %766 = vmatprep.subr.mxu0 0.0
      %767 = vmatpush1.msra.mxu0 0.0
      %768 = vmatprep.subr.mxu0 0.0
      %769 = vmatpush1.msra.mxu0 0.0
      %770 = vmatprep.mubr.f32.mxu0 0.0
      %v771 = vand.u32 %v174, 4294901760
      %772 = vmatmul.mubr.f32.gmra.mrb[0].mxu0 %v771
      %v773 = vpop.f32.mrb[0].mxu0
      %v774 = vadd.f32 %v647, %v773
      %v775 = vpop.f32.mrb[0].mxu0
      %776 = vmatprep.mubr.f32.mxu0 0.0
      %v777 = vand.u32 %v175, 4294901760
      %778 = vmatmul.mubr.f32.gmra.mrb[0].mxu0 %v777
      %v779 = vpop.f32.mrb[0].mxu0
      %v780 = vadd.f32 %v655, %v779
      %v781 = vpop.f32.mrb[0].mxu0
      %782 = vdwg.mxu0
      %783 = vmatprep.subr.mxu0 0.0
      %v784 = vand.u32 %v176, 4294901760
      %785 = vmatpush1.msra.mxu0 %v784
      %786 = vmatprep.subr.mxu0 0.0
      %v787 = vand.u32 %v177, 4294901760
      %788 = vmatpush1.msra.mxu0 %v787
      %789 = vmatprep.subr.mxu0 0.0
      %v790 = vand.u32 %v178, 4294901760
      %791 = vmatpush1.msra.mxu0 %v790
      %792 = vmatprep.subr.mxu0 0.0
      %v793 = vand.u32 %v179, 4294901760
      %794 = vmatpush1.msra.mxu0 %v793
      %795 = vmatprep.subr.mxu0 0.0
      %v796 = vand.u32 %v180, 4294901760
      %797 = vmatpush1.msra.mxu0 %v796
      %798 = vmatprep.subr.mxu0 0.0
      %v799 = vand.u32 %v181, 4294901760
      %800 = vmatpush1.msra.mxu0 %v799
      %801 = vmatprep.subr.mxu0 0.0
      %v802 = vand.u32 %v182, 4294901760
      %803 = vmatpush1.msra.mxu0 %v802
      %804 = vmatprep.subr.mxu0 0.0
      %v805 = vand.u32 %v183, 4294901760
      %806 = vmatpush1.msra.mxu0 %v805
      %807 = vmatprep.subr.mxu0 0.0
      %v808 = vand.u32 %v184, 4294901760
      %809 = vmatpush1.msra.mxu0 %v808
      %810 = vmatprep.subr.mxu0 0.0
      %v811 = vand.u32 %v185, 4294901760
      %812 = vmatpush1.msra.mxu0 %v811
      %813 = vmatprep.subr.mxu0 0.0
      %v814 = vand.u32 %v186, 4294901760
      %815 = vmatpush1.msra.mxu0 %v814
      %816 = vmatprep.subr.mxu0 0.0
      %v817 = vand.u32 %v187, 4294901760
      %818 = vmatpush1.msra.mxu0 %v817
      %819 = vmatprep.subr.mxu0 0.0
      %v820 = vand.u32 %v188, 4294901760
      %821 = vmatpush1.msra.mxu0 %v820
      %822 = vmatprep.subr.mxu0 0.0
      %v823 = vand.u32 %v189, 4294901760
      %824 = vmatpush1.msra.mxu0 %v823
      %825 = vmatprep.subr.mxu0 0.0
      %v826 = vand.u32 %v190, 4294901760
      %827 = vmatpush1.msra.mxu0 %v826
      %828 = vmatprep.subr.mxu0 0.0
      %v829 = vand.u32 %v191, 4294901760
      %830 = vmatpush1.msra.mxu0 %v829
      %831 = vmatprep.subr.mxu0 0.0
      %832 = vmatpush1.msra.mxu0 0.0
      %833 = vmatprep.subr.mxu0 0.0
      %834 = vmatpush1.msra.mxu0 0.0
      %835 = vmatprep.subr.mxu0 0.0
      %836 = vmatpush1.msra.mxu0 0.0
      %837 = vmatprep.subr.mxu0 0.0
      %838 = vmatpush1.msra.mxu0 0.0
      %839 = vmatprep.subr.mxu0 0.0
      %840 = vmatpush1.msra.mxu0 0.0
      %841 = vmatprep.subr.mxu0 0.0
      %842 = vmatpush1.msra.mxu0 0.0
      %843 = vmatprep.subr.mxu0 0.0
      %844 = vmatpush1.msra.mxu0 0.0
      %845 = vmatprep.subr.mxu0 0.0
      %846 = vmatpush1.msra.mxu0 0.0
      %847 = vmatprep.subr.mxu0 0.0
      %848 = vmatpush1.msra.mxu0 0.0
      %849 = vmatprep.subr.mxu0 0.0
      %850 = vmatpush1.msra.mxu0 0.0
      %851 = vmatprep.subr.mxu0 0.0
      %852 = vmatpush1.msra.mxu0 0.0
      %853 = vmatprep.subr.mxu0 0.0
      %854 = vmatpush1.msra.mxu0 0.0
      %855 = vmatprep.subr.mxu0 0.0
      %856 = vmatpush1.msra.mxu0 0.0
      %857 = vmatprep.subr.mxu0 0.0
      %858 = vmatpush1.msra.mxu0 0.0
      %859 = vmatprep.subr.mxu0 0.0
      %860 = vmatpush1.msra.mxu0 0.0
      %861 = vmatprep.subr.mxu0 0.0
      %862 = vmatpush1.msra.mxu0 0.0
      %863 = vmatprep.mubr.f32.mxu0 0.0
      %v864 = vand.u32 %v174, 4294901760
      %865 = vmatmul.mubr.f32.gmra.mrb[0].mxu0 %v864
      %v866 = vpop.f32.mrb[0].mxu0
      %v867 = vadd.f32 %v774, %v866
      %v868 = vpop.f32.mrb[0].mxu0
      %869 = vmatprep.mubr.f32.mxu0 0.0
      %v870 = vand.u32 %v175, 4294901760
      %871 = vmatmul.mubr.f32.gmra.mrb[0].mxu0 %v870
      %v872 = vpop.f32.mrb[0].mxu0
      %v873 = vadd.f32 %v780, %v872
      %v874 = vpop.f32.mrb[0].mxu0
      %875 = vdwg.mxu0
      %v876 = vmul.f32 %v174, %v174
      %v877 = vmul.f32 %v175, %v175
      %878 = vmatprep.subr.mxu0 0.0
      %v879 = vand.u32 %v176, 4294901760
      %880 = vmatpush1.msra.mxu0 %v879
      %881 = vmatprep.subr.mxu0 0.0
      %v882 = vand.u32 %v177, 4294901760
      %883 = vmatpush1.msra.mxu0 %v882
      %884 = vmatprep.subr.mxu0 0.0
      %v885 = vand.u32 %v178, 4294901760
      %886 = vmatpush1.msra.mxu0 %v885
      %887 = vmatprep.subr.mxu0 0.0
      %v888 = vand.u32 %v179, 4294901760
      %889 = vmatpush1.msra.mxu0 %v888
      %890 = vmatprep.subr.mxu0 0.0
      %v891 = vand.u32 %v180, 4294901760
      %892 = vmatpush1.msra.mxu0 %v891
      %893 = vmatprep.subr.mxu0 0.0
      %v894 = vand.u32 %v181, 4294901760
      %895 = vmatpush1.msra.mxu0 %v894
      %896 = vmatprep.subr.mxu0 0.0
      %v897 = vand.u32 %v182, 4294901760
      %898 = vmatpush1.msra.mxu0 %v897
      %899 = vmatprep.subr.mxu0 0.0
      %v900 = vand.u32 %v183, 4294901760
      %901 = vmatpush1.msra.mxu0 %v900
      %902 = vmatprep.subr.mxu0 0.0
      %v903 = vand.u32 %v184, 4294901760
      %904 = vmatpush1.msra.mxu0 %v903
      %905 = vmatprep.subr.mxu0 0.0
      %v906 = vand.u32 %v185, 4294901760
      %907 = vmatpush1.msra.mxu0 %v906
      %908 = vmatprep.subr.mxu0 0.0
      %v909 = vand.u32 %v186, 4294901760
      %910 = vmatpush1.msra.mxu0 %v909
      %911 = vmatprep.subr.mxu0 0.0
      %v912 = vand.u32 %v187, 4294901760
      %913 = vmatpush1.msra.mxu0 %v912
      %914 = vmatprep.subr.mxu0 0.0
      %v915 = vand.u32 %v188, 4294901760
      %916 = vmatpush1.msra.mxu0 %v915
      %917 = vmatprep.subr.mxu0 0.0
      %v918 = vand.u32 %v189, 4294901760
      %919 = vmatpush1.msra.mxu0 %v918
      %920 = vmatprep.subr.mxu0 0.0
      %v921 = vand.u32 %v190, 4294901760
      %922 = vmatpush1.msra.mxu0 %v921
      %923 = vmatprep.subr.mxu0 0.0
      %v924 = vand.u32 %v191, 4294901760
      %925 = vmatpush1.msra.mxu0 %v924
      %926 = vmatprep.subr.mxu0 0.0
      %927 = vmatpush1.msra.mxu0 0.0
      %928 = vmatprep.subr.mxu0 0.0
      %929 = vmatpush1.msra.mxu0 0.0
      %930 = vmatprep.subr.mxu0 0.0
      %931 = vmatpush1.msra.mxu0 0.0
      %932 = vmatprep.subr.mxu0 0.0
      %933 = vmatpush1.msra.mxu0 0.0
      %934 = vmatprep.subr.mxu0 0.0
      %935 = vmatpush1.msra.mxu0 0.0
      %936 = vmatprep.subr.mxu0 0.0
      %937 = vmatpush1.msra.mxu0 0.0
      %938 = vmatprep.subr.mxu0 0.0
      %939 = vmatpush1.msra.mxu0 0.0
      %940 = vmatprep.subr.mxu0 0.0
      %941 = vmatpush1.msra.mxu0 0.0
      %942 = vmatprep.subr.mxu0 0.0
      %943 = vmatpush1.msra.mxu0 0.0
      %944 = vmatprep.subr.mxu0 0.0
      %945 = vmatpush1.msra.mxu0 0.0
      %946 = vmatprep.subr.mxu0 0.0
      %947 = vmatpush1.msra.mxu0 0.0
      %948 = vmatprep.subr.mxu0 0.0
      %949 = vmatpush1.msra.mxu0 0.0
      %950 = vmatprep.subr.mxu0 0.0
      %951 = vmatpush1.msra.mxu0 0.0
      %952 = vmatprep.subr.mxu0 0.0
      %953 = vmatpush1.msra.mxu0 0.0
      %954 = vmatprep.subr.mxu0 0.0
      %955 = vmatpush1.msra.mxu0 0.0
      %956 = vmatprep.subr.mxu0 0.0
      %957 = vmatpush1.msra.mxu0 0.0
      %958 = vmatprep.mubr.f32.mxu0 0.0
      %v959 = vand.u32 %v876, 4294901760
      %v960 = vsub.f32 %v876, %v959
      %v961 = vand.u32 %v960, 4294901760
      %v962 = vsub.f32 %v960, %v961
      %v963 = vand.u32 %v962, 4294901760
      %964 = vmatmul.mubr.f32.gmra.mrb[0].mxu0 %v963
      %v965 = vpop.f32.mrb[0].mxu0
      %v966 = vadd.f32 0.0, %v965
      %v967 = vpop.f32.mrb[0].mxu0
      %968 = vmatprep.mubr.f32.mxu0 0.0
      %v969 = vand.u32 %v877, 4294901760
      %v970 = vsub.f32 %v877, %v969
      %v971 = vand.u32 %v970, 4294901760
      %v972 = vsub.f32 %v970, %v971
      %v973 = vand.u32 %v972, 4294901760
      %974 = vmatmul.mubr.f32.gmra.mrb[0].mxu0 %v973
      %v975 = vpop.f32.mrb[0].mxu0
      %v976 = vadd.f32 0.0, %v975
      %v977 = vpop.f32.mrb[0].mxu0
      %978 = vdwg.mxu0
      %979 = vmatprep.subr.mxu0 0.0
      %v980 = vand.u32 %v176, 4294901760
      %v981 = vsub.f32 %v176, %v980
      %v982 = vand.u32 %v981, 4294901760
      %v983 = vsub.f32 %v981, %v982
      %v984 = vand.u32 %v983, 4294901760
      %985 = vmatpush1.msra.mxu0 %v984
      %986 = vmatprep.subr.mxu0 0.0
      %v987 = vand.u32 %v177, 4294901760
      %v988 = vsub.f32 %v177, %v987
      %v989 = vand.u32 %v988, 4294901760
      %v990 = vsub.f32 %v988, %v989
      %v991 = vand.u32 %v990, 4294901760
      %992 = vmatpush1.msra.mxu0 %v991
      %993 = vmatprep.subr.mxu0 0.0
      %v994 = vand.u32 %v178, 4294901760
      %v995 = vsub.f32 %v178, %v994
      %v996 = vand.u32 %v995, 4294901760
      %v997 = vsub.f32 %v995, %v996
      %v998 = vand.u32 %v997, 4294901760
      %999 = vmatpush1.msra.mxu0 %v998
      %1000 = vmatprep.subr.mxu0 0.0
      %v1001 = vand.u32 %v179, 4294901760
      %v1002 = vsub.f32 %v179, %v1001
      %v1003 = vand.u32 %v1002, 4294901760
      %v1004 = vsub.f32 %v1002, %v1003
      %v1005 = vand.u32 %v1004, 4294901760
      %1006 = vmatpush1.msra.mxu0 %v1005
      %1007 = vmatprep.subr.mxu0 0.0
      %v1008 = vand.u32 %v180, 4294901760
      %v1009 = vsub.f32 %v180, %v1008
      %v1010 = vand.u32 %v1009, 4294901760
      %v1011 = vsub.f32 %v1009, %v1010
      %v1012 = vand.u32 %v1011, 4294901760
      %1013 = vmatpush1.msra.mxu0 %v1012
      %1014 = vmatprep.subr.mxu0 0.0
      %v1015 = vand.u32 %v181, 4294901760
      %v1016 = vsub.f32 %v181, %v1015
      %v1017 = vand.u32 %v1016, 4294901760
      %v1018 = vsub.f32 %v1016, %v1017
      %v1019 = vand.u32 %v1018, 4294901760
      %1020 = vmatpush1.msra.mxu0 %v1019
      %1021 = vmatprep.subr.mxu0 0.0
      %v1022 = vand.u32 %v182, 4294901760
      %v1023 = vsub.f32 %v182, %v1022
      %v1024 = vand.u32 %v1023, 4294901760
      %v1025 = vsub.f32 %v1023, %v1024
      %v1026 = vand.u32 %v1025, 4294901760
      %1027 = vmatpush1.msra.mxu0 %v1026
      %1028 = vmatprep.subr.mxu0 0.0
      %v1029 = vand.u32 %v183, 4294901760
      %v1030 = vsub.f32 %v183, %v1029
      %v1031 = vand.u32 %v1030, 4294901760
      %v1032 = vsub.f32 %v1030, %v1031
      %v1033 = vand.u32 %v1032, 4294901760
      %1034 = vmatpush1.msra.mxu0 %v1033
      %1035 = vmatprep.subr.mxu0 0.0
      %v1036 = vand.u32 %v184, 4294901760
      %v1037 = vsub.f32 %v184, %v1036
      %v1038 = vand.u32 %v1037, 4294901760
      %v1039 = vsub.f32 %v1037, %v1038
      %v1040 = vand.u32 %v1039, 4294901760
      %1041 = vmatpush1.msra.mxu0 %v1040
      %1042 = vmatprep.subr.mxu0 0.0
      %v1043 = vand.u32 %v185, 4294901760
      %v1044 = vsub.f32 %v185, %v1043
      %v1045 = vand.u32 %v1044, 4294901760
      %v1046 = vsub.f32 %v1044, %v1045
      %v1047 = vand.u32 %v1046, 4294901760
      %1048 = vmatpush1.msra.mxu0 %v1047
      %1049 = vmatprep.subr.mxu0 0.0
      %v1050 = vand.u32 %v186, 4294901760
      %v1051 = vsub.f32 %v186, %v1050
      %v1052 = vand.u32 %v1051, 4294901760
      %v1053 = vsub.f32 %v1051, %v1052
      %v1054 = vand.u32 %v1053, 4294901760
      %1055 = vmatpush1.msra.mxu0 %v1054
      %1056 = vmatprep.subr.mxu0 0.0
      %v1057 = vand.u32 %v187, 4294901760
      %v1058 = vsub.f32 %v187, %v1057
      %v1059 = vand.u32 %v1058, 4294901760
      %v1060 = vsub.f32 %v1058, %v1059
      %v1061 = vand.u32 %v1060, 4294901760
      %1062 = vmatpush1.msra.mxu0 %v1061
      %1063 = vmatprep.subr.mxu0 0.0
      %v1064 = vand.u32 %v188, 4294901760
      %v1065 = vsub.f32 %v188, %v1064
      %v1066 = vand.u32 %v1065, 4294901760
      %v1067 = vsub.f32 %v1065, %v1066
      %v1068 = vand.u32 %v1067, 4294901760
      %1069 = vmatpush1.msra.mxu0 %v1068
      %1070 = vmatprep.subr.mxu0 0.0
      %v1071 = vand.u32 %v189, 4294901760
      %v1072 = vsub.f32 %v189, %v1071
      %v1073 = vand.u32 %v1072, 4294901760
      %v1074 = vsub.f32 %v1072, %v1073
      %v1075 = vand.u32 %v1074, 4294901760
      %1076 = vmatpush1.msra.mxu0 %v1075
      %1077 = vmatprep.subr.mxu0 0.0
      %v1078 = vand.u32 %v190, 4294901760
      %v1079 = vsub.f32 %v190, %v1078
      %v1080 = vand.u32 %v1079, 4294901760
      %v1081 = vsub.f32 %v1079, %v1080
      %v1082 = vand.u32 %v1081, 4294901760
      %1083 = vmatpush1.msra.mxu0 %v1082
      %1084 = vmatprep.subr.mxu0 0.0
      %v1085 = vand.u32 %v191, 4294901760
      %v1086 = vsub.f32 %v191, %v1085
      %v1087 = vand.u32 %v1086, 4294901760
      %v1088 = vsub.f32 %v1086, %v1087
      %v1089 = vand.u32 %v1088, 4294901760
      %1090 = vmatpush1.msra.mxu0 %v1089
      %1091 = vmatprep.subr.mxu0 0.0
      %1092 = vmatpush1.msra.mxu0 0.0
      %1093 = vmatprep.subr.mxu0 0.0
      %1094 = vmatpush1.msra.mxu0 0.0
      %1095 = vmatprep.subr.mxu0 0.0
      %1096 = vmatpush1.msra.mxu0 0.0
      %1097 = vmatprep.subr.mxu0 0.0
      %1098 = vmatpush1.msra.mxu0 0.0
      %1099 = vmatprep.subr.mxu0 0.0
      %1100 = vmatpush1.msra.mxu0 0.0
      %1101 = vmatprep.subr.mxu0 0.0
      %1102 = vmatpush1.msra.mxu0 0.0
      %1103 = vmatprep.subr.mxu0 0.0
      %1104 = vmatpush1.msra.mxu0 0.0
      %1105 = vmatprep.subr.mxu0 0.0
      %1106 = vmatpush1.msra.mxu0 0.0
      %1107 = vmatprep.subr.mxu0 0.0
      %1108 = vmatpush1.msra.mxu0 0.0
      %1109 = vmatprep.subr.mxu0 0.0
      %1110 = vmatpush1.msra.mxu0 0.0
      %1111 = vmatprep.subr.mxu0 0.0
      %1112 = vmatpush1.msra.mxu0 0.0
      %1113 = vmatprep.subr.mxu0 0.0
      %1114 = vmatpush1.msra.mxu0 0.0
      %1115 = vmatprep.subr.mxu0 0.0
      %1116 = vmatpush1.msra.mxu0 0.0
      %1117 = vmatprep.subr.mxu0 0.0
      %1118 = vmatpush1.msra.mxu0 0.0
      %1119 = vmatprep.subr.mxu0 0.0
      %1120 = vmatpush1.msra.mxu0 0.0
      %1121 = vmatprep.subr.mxu0 0.0
      %1122 = vmatpush1.msra.mxu0 0.0
      %1123 = vmatprep.mubr.f32.mxu0 0.0
      %v1124 = vand.u32 %v876, 4294901760
      %1125 = vmatmul.mubr.f32.gmra.mrb[0].mxu0 %v1124
      %v1126 = vpop.f32.mrb[0].mxu0
      %v1127 = vadd.f32 %v966, %v1126
      %v1128 = vpop.f32.mrb[0].mxu0
      %1129 = vmatprep.mubr.f32.mxu0 0.0
      %v1130 = vand.u32 %v877, 4294901760
      %1131 = vmatmul.mubr.f32.gmra.mrb[0].mxu0 %v1130
      %v1132 = vpop.f32.mrb[0].mxu0
      %v1133 = vadd.f32 %v976, %v1132
      %v1134 = vpop.f32.mrb[0].mxu0
      %1135 = vdwg.mxu0
      %1136 = vmatprep.subr.mxu0 0.0
      %v1137 = vand.u32 %v176, 4294901760
      %v1138 = vsub.f32 %v176, %v1137
      %1139 = vmatpush1.msra.mxu0 %v1138
      %1140 = vmatprep.subr.mxu0 0.0
      %v1141 = vand.u32 %v177, 4294901760
      %v1142 = vsub.f32 %v177, %v1141
      %1143 = vmatpush1.msra.mxu0 %v1142
      %1144 = vmatprep.subr.mxu0 0.0
      %v1145 = vand.u32 %v178, 4294901760
      %v1146 = vsub.f32 %v178, %v1145
      %1147 = vmatpush1.msra.mxu0 %v1146
      %1148 = vmatprep.subr.mxu0 0.0
      %v1149 = vand.u32 %v179, 4294901760
      %v1150 = vsub.f32 %v179, %v1149
      %1151 = vmatpush1.msra.mxu0 %v1150
      %1152 = vmatprep.subr.mxu0 0.0
      %v1153 = vand.u32 %v180, 4294901760
      %v1154 = vsub.f32 %v180, %v1153
      %1155 = vmatpush1.msra.mxu0 %v1154
      %1156 = vmatprep.subr.mxu0 0.0
      %v1157 = vand.u32 %v181, 4294901760
      %v1158 = vsub.f32 %v181, %v1157
      %1159 = vmatpush1.msra.mxu0 %v1158
      %1160 = vmatprep.subr.mxu0 0.0
      %v1161 = vand.u32 %v182, 4294901760
      %v1162 = vsub.f32 %v182, %v1161
      %1163 = vmatpush1.msra.mxu0 %v1162
      %1164 = vmatprep.subr.mxu0 0.0
      %v1165 = vand.u32 %v183, 4294901760
      %v1166 = vsub.f32 %v183, %v1165
      %1167 = vmatpush1.msra.mxu0 %v1166
      %1168 = vmatprep.subr.mxu0 0.0
      %v1169 = vand.u32 %v184, 4294901760
      %v1170 = vsub.f32 %v184, %v1169
      %1171 = vmatpush1.msra.mxu0 %v1170
      %1172 = vmatprep.subr.mxu0 0.0
      %v1173 = vand.u32 %v185, 4294901760
      %v1174 = vsub.f32 %v185, %v1173
      %1175 = vmatpush1.msra.mxu0 %v1174
      %1176 = vmatprep.subr.mxu0 0.0
      %v1177 = vand.u32 %v186, 4294901760
      %v1178 = vsub.f32 %v186, %v1177
      %1179 = vmatpush1.msra.mxu0 %v1178
      %1180 = vmatprep.subr.mxu0 0.0
      %v1181 = vand.u32 %v187, 4294901760
      %v1182 = vsub.f32 %v187, %v1181
      %1183 = vmatpush1.msra.mxu0 %v1182
      %1184 = vmatprep.subr.mxu0 0.0
      %v1185 = vand.u32 %v188, 4294901760
      %v1186 = vsub.f32 %v188, %v1185
      %1187 = vmatpush1.msra.mxu0 %v1186
      %1188 = vmatprep.subr.mxu0 0.0
      %v1189 = vand.u32 %v189, 4294901760
      %v1190 = vsub.f32 %v189, %v1189
      %1191 = vmatpush1.msra.mxu0 %v1190
      %1192 = vmatprep.subr.mxu0 0.0
      %v1193 = vand.u32 %v190, 4294901760
      %v1194 = vsub.f32 %v190, %v1193
      %1195 = vmatpush1.msra.mxu0 %v1194
      %1196 = vmatprep.subr.mxu0 0.0
      %v1197 = vand.u32 %v191, 4294901760
      %v1198 = vsub.f32 %v191, %v1197
      %1199 = vmatpush1.msra.mxu0 %v1198
      %1200 = vmatprep.subr.mxu0 0.0
      %1201 = vmatpush1.msra.mxu0 0.0
      %1202 = vmatprep.subr.mxu0 0.0
      %1203 = vmatpush1.msra.mxu0 0.0
      %1204 = vmatprep.subr.mxu0 0.0
      %1205 = vmatpush1.msra.mxu0 0.0
      %1206 = vmatprep.subr.mxu0 0.0
      %1207 = vmatpush1.msra.mxu0 0.0
      %1208 = vmatprep.subr.mxu0 0.0
      %1209 = vmatpush1.msra.mxu0 0.0
      %1210 = vmatprep.subr.mxu0 0.0
      %1211 = vmatpush1.msra.mxu0 0.0
      %1212 = vmatprep.subr.mxu0 0.0
      %1213 = vmatpush1.msra.mxu0 0.0
      %1214 = vmatprep.subr.mxu0 0.0
      %1215 = vmatpush1.msra.mxu0 0.0
      %1216 = vmatprep.subr.mxu0 0.0
      %1217 = vmatpush1.msra.mxu0 0.0
      %1218 = vmatprep.subr.mxu0 0.0
      %1219 = vmatpush1.msra.mxu0 0.0
      %1220 = vmatprep.subr.mxu0 0.0
      %1221 = vmatpush1.msra.mxu0 0.0
      %1222 = vmatprep.subr.mxu0 0.0
      %1223 = vmatpush1.msra.mxu0 0.0
      %1224 = vmatprep.subr.mxu0 0.0
      %1225 = vmatpush1.msra.mxu0 0.0
      %1226 = vmatprep.subr.mxu0 0.0
      %1227 = vmatpush1.msra.mxu0 0.0
      %1228 = vmatprep.subr.mxu0 0.0
      %1229 = vmatpush1.msra.mxu0 0.0
      %1230 = vmatprep.subr.mxu0 0.0
      %1231 = vmatpush1.msra.mxu0 0.0
      %1232 = vmatprep.mubr.f32.mxu0 0.0
      %v1233 = vand.u32 %v876, 4294901760
      %v1234 = vsub.f32 %v876, %v1233
      %1235 = vmatmul.mubr.f32.gmra.mrb[0].mxu0 %v1234
      %v1236 = vpop.f32.mrb[0].mxu0
      %v1237 = vadd.f32 %v1127, %v1236
      %v1238 = vpop.f32.mrb[0].mxu0
      %1239 = vmatprep.mubr.f32.mxu0 0.0
      %v1240 = vand.u32 %v877, 4294901760
      %v1241 = vsub.f32 %v877, %v1240
      %1242 = vmatmul.mubr.f32.gmra.mrb[0].mxu0 %v1241
      %v1243 = vpop.f32.mrb[0].mxu0
      %v1244 = vadd.f32 %v1133, %v1243
      %v1245 = vpop.f32.mrb[0].mxu0
      %1246 = vdwg.mxu0
      %1247 = vmatprep.subr.mxu0 0.0
      %v1248 = vand.u32 %v176, 4294901760
      %1249 = vmatpush1.msra.mxu0 %v1248
      %1250 = vmatprep.subr.mxu0 0.0
      %v1251 = vand.u32 %v177, 4294901760
      %1252 = vmatpush1.msra.mxu0 %v1251
      %1253 = vmatprep.subr.mxu0 0.0
      %v1254 = vand.u32 %v178, 4294901760
      %1255 = vmatpush1.msra.mxu0 %v1254
      %1256 = vmatprep.subr.mxu0 0.0
      %v1257 = vand.u32 %v179, 4294901760
      %1258 = vmatpush1.msra.mxu0 %v1257
      %1259 = vmatprep.subr.mxu0 0.0
      %v1260 = vand.u32 %v180, 4294901760
      %1261 = vmatpush1.msra.mxu0 %v1260
      %1262 = vmatprep.subr.mxu0 0.0
      %v1263 = vand.u32 %v181, 4294901760
      %1264 = vmatpush1.msra.mxu0 %v1263
      %1265 = vmatprep.subr.mxu0 0.0
      %v1266 = vand.u32 %v182, 4294901760
      %1267 = vmatpush1.msra.mxu0 %v1266
      %1268 = vmatprep.subr.mxu0 0.0
      %v1269 = vand.u32 %v183, 4294901760
      %1270 = vmatpush1.msra.mxu0 %v1269
      %1271 = vmatprep.subr.mxu0 0.0
      %v1272 = vand.u32 %v184, 4294901760
      %1273 = vmatpush1.msra.mxu0 %v1272
      %1274 = vmatprep.subr.mxu0 0.0
      %v1275 = vand.u32 %v185, 4294901760
      %1276 = vmatpush1.msra.mxu0 %v1275
      %1277 = vmatprep.subr.mxu0 0.0
      %v1278 = vand.u32 %v186, 4294901760
      %1279 = vmatpush1.msra.mxu0 %v1278
      %1280 = vmatprep.subr.mxu0 0.0
      %v1281 = vand.u32 %v187, 4294901760
      %1282 = vmatpush1.msra.mxu0 %v1281
      %1283 = vmatprep.subr.mxu0 0.0
      %v1284 = vand.u32 %v188, 4294901760
      %1285 = vmatpush1.msra.mxu0 %v1284
      %1286 = vmatprep.subr.mxu0 0.0
      %v1287 = vand.u32 %v189, 4294901760
      %1288 = vmatpush1.msra.mxu0 %v1287
      %1289 = vmatprep.subr.mxu0 0.0
      %v1290 = vand.u32 %v190, 4294901760
      %1291 = vmatpush1.msra.mxu0 %v1290
      %1292 = vmatprep.subr.mxu0 0.0
      %v1293 = vand.u32 %v191, 4294901760
      %1294 = vmatpush1.msra.mxu0 %v1293
      %1295 = vmatprep.subr.mxu0 0.0
      %1296 = vmatpush1.msra.mxu0 0.0
      %1297 = vmatprep.subr.mxu0 0.0
      %1298 = vmatpush1.msra.mxu0 0.0
      %1299 = vmatprep.subr.mxu0 0.0
      %1300 = vmatpush1.msra.mxu0 0.0
      %1301 = vmatprep.subr.mxu0 0.0
      %1302 = vmatpush1.msra.mxu0 0.0
      %1303 = vmatprep.subr.mxu0 0.0
      %1304 = vmatpush1.msra.mxu0 0.0
      %1305 = vmatprep.subr.mxu0 0.0
      %1306 = vmatpush1.msra.mxu0 0.0
      %1307 = vmatprep.subr.mxu0 0.0
      %1308 = vmatpush1.msra.mxu0 0.0
      %1309 = vmatprep.subr.mxu0 0.0
      %1310 = vmatpush1.msra.mxu0 0.0
      %1311 = vmatprep.subr.mxu0 0.0
      %1312 = vmatpush1.msra.mxu0 0.0
      %1313 = vmatprep.subr.mxu0 0.0
      %1314 = vmatpush1.msra.mxu0 0.0
      %1315 = vmatprep.subr.mxu0 0.0
      %1316 = vmatpush1.msra.mxu0 0.0
      %1317 = vmatprep.subr.mxu0 0.0
      %1318 = vmatpush1.msra.mxu0 0.0
      %1319 = vmatprep.subr.mxu0 0.0
      %1320 = vmatpush1.msra.mxu0 0.0
      %1321 = vmatprep.subr.mxu0 0.0
      %1322 = vmatpush1.msra.mxu0 0.0
      %1323 = vmatprep.subr.mxu0 0.0
      %1324 = vmatpush1.msra.mxu0 0.0
      %1325 = vmatprep.subr.mxu0 0.0
      %1326 = vmatpush1.msra.mxu0 0.0
      %1327 = vmatprep.mubr.f32.mxu0 0.0
      %v1328 = vand.u32 %v876, 4294901760
      %v1329 = vsub.f32 %v876, %v1328
      %v1330 = vand.u32 %v1329, 4294901760
      %1331 = vmatmul.mubr.f32.gmra.mrb[0].mxu0 %v1330
      %v1332 = vpop.f32.mrb[0].mxu0
      %v1333 = vadd.f32 %v1237, %v1332
      %v1334 = vpop.f32.mrb[0].mxu0
      %1335 = vmatprep.mubr.f32.mxu0 0.0
      %v1336 = vand.u32 %v877, 4294901760
      %v1337 = vsub.f32 %v877, %v1336
      %v1338 = vand.u32 %v1337, 4294901760
      %1339 = vmatmul.mubr.f32.gmra.mrb[0].mxu0 %v1338
      %v1340 = vpop.f32.mrb[0].mxu0
      %v1341 = vadd.f32 %v1244, %v1340
      %v1342 = vpop.f32.mrb[0].mxu0
      %1343 = vdwg.mxu0
      %1344 = vmatprep.subr.mxu0 0.0
      %v1345 = vand.u32 %v176, 4294901760
      %v1346 = vsub.f32 %v176, %v1345
      %v1347 = vand.u32 %v1346, 4294901760
      %1348 = vmatpush1.msra.mxu0 %v1347
      %1349 = vmatprep.subr.mxu0 0.0
      %v1350 = vand.u32 %v177, 4294901760
      %v1351 = vsub.f32 %v177, %v1350
      %v1352 = vand.u32 %v1351, 4294901760
      %1353 = vmatpush1.msra.mxu0 %v1352
      %1354 = vmatprep.subr.mxu0 0.0
      %v1355 = vand.u32 %v178, 4294901760
      %v1356 = vsub.f32 %v178, %v1355
      %v1357 = vand.u32 %v1356, 4294901760
      %1358 = vmatpush1.msra.mxu0 %v1357
      %1359 = vmatprep.subr.mxu0 0.0
      %v1360 = vand.u32 %v179, 4294901760
      %v1361 = vsub.f32 %v179, %v1360
      %v1362 = vand.u32 %v1361, 4294901760
      %1363 = vmatpush1.msra.mxu0 %v1362
      %1364 = vmatprep.subr.mxu0 0.0
      %v1365 = vand.u32 %v180, 4294901760
      %v1366 = vsub.f32 %v180, %v1365
      %v1367 = vand.u32 %v1366, 4294901760
      %1368 = vmatpush1.msra.mxu0 %v1367
      %1369 = vmatprep.subr.mxu0 0.0
      %v1370 = vand.u32 %v181, 4294901760
      %v1371 = vsub.f32 %v181, %v1370
      %v1372 = vand.u32 %v1371, 4294901760
      %1373 = vmatpush1.msra.mxu0 %v1372
      %1374 = vmatprep.subr.mxu0 0.0
      %v1375 = vand.u32 %v182, 4294901760
      %v1376 = vsub.f32 %v182, %v1375
      %v1377 = vand.u32 %v1376, 4294901760
      %1378 = vmatpush1.msra.mxu0 %v1377
      %1379 = vmatprep.subr.mxu0 0.0
      %v1380 = vand.u32 %v183, 4294901760
      %v1381 = vsub.f32 %v183, %v1380
      %v1382 = vand.u32 %v1381, 4294901760
      %1383 = vmatpush1.msra.mxu0 %v1382
      %1384 = vmatprep.subr.mxu0 0.0
      %v1385 = vand.u32 %v184, 4294901760
      %v1386 = vsub.f32 %v184, %v1385
      %v1387 = vand.u32 %v1386, 4294901760
      %1388 = vmatpush1.msra.mxu0 %v1387
      %1389 = vmatprep.subr.mxu0 0.0
      %v1390 = vand.u32 %v185, 4294901760
      %v1391 = vsub.f32 %v185, %v1390
      %v1392 = vand.u32 %v1391, 4294901760
      %1393 = vmatpush1.msra.mxu0 %v1392
      %1394 = vmatprep.subr.mxu0 0.0
      %v1395 = vand.u32 %v186, 4294901760
      %v1396 = vsub.f32 %v186, %v1395
      %v1397 = vand.u32 %v1396, 4294901760
      %1398 = vmatpush1.msra.mxu0 %v1397
      %1399 = vmatprep.subr.mxu0 0.0
      %v1400 = vand.u32 %v187, 4294901760
      %v1401 = vsub.f32 %v187, %v1400
      %v1402 = vand.u32 %v1401, 4294901760
      %1403 = vmatpush1.msra.mxu0 %v1402
      %1404 = vmatprep.subr.mxu0 0.0
      %v1405 = vand.u32 %v188, 4294901760
      %v1406 = vsub.f32 %v188, %v1405
      %v1407 = vand.u32 %v1406, 4294901760
      %1408 = vmatpush1.msra.mxu0 %v1407
      %1409 = vmatprep.subr.mxu0 0.0
      %v1410 = vand.u32 %v189, 4294901760
      %v1411 = vsub.f32 %v189, %v1410
      %v1412 = vand.u32 %v1411, 4294901760
      %1413 = vmatpush1.msra.mxu0 %v1412
      %1414 = vmatprep.subr.mxu0 0.0
      %v1415 = vand.u32 %v190, 4294901760
      %v1416 = vsub.f32 %v190, %v1415
      %v1417 = vand.u32 %v1416, 4294901760
      %1418 = vmatpush1.msra.mxu0 %v1417
      %1419 = vmatprep.subr.mxu0 0.0
      %v1420 = vand.u32 %v191, 4294901760
      %v1421 = vsub.f32 %v191, %v1420
      %v1422 = vand.u32 %v1421, 4294901760
      %1423 = vmatpush1.msra.mxu0 %v1422
      %1424 = vmatprep.subr.mxu0 0.0
      %1425 = vmatpush1.msra.mxu0 0.0
      %1426 = vmatprep.subr.mxu0 0.0
      %1427 = vmatpush1.msra.mxu0 0.0
      %1428 = vmatprep.subr.mxu0 0.0
      %1429 = vmatpush1.msra.mxu0 0.0
      %1430 = vmatprep.subr.mxu0 0.0
      %1431 = vmatpush1.msra.mxu0 0.0
      %1432 = vmatprep.subr.mxu0 0.0
      %1433 = vmatpush1.msra.mxu0 0.0
      %1434 = vmatprep.subr.mxu0 0.0
      %1435 = vmatpush1.msra.mxu0 0.0
      %1436 = vmatprep.subr.mxu0 0.0
      %1437 = vmatpush1.msra.mxu0 0.0
      %1438 = vmatprep.subr.mxu0 0.0
      %1439 = vmatpush1.msra.mxu0 0.0
      %1440 = vmatprep.subr.mxu0 0.0
      %1441 = vmatpush1.msra.mxu0 0.0
      %1442 = vmatprep.subr.mxu0 0.0
      %1443 = vmatpush1.msra.mxu0 0.0
      %1444 = vmatprep.subr.mxu0 0.0
      %1445 = vmatpush1.msra.mxu0 0.0
      %1446 = vmatprep.subr.mxu0 0.0
      %1447 = vmatpush1.msra.mxu0 0.0
      %1448 = vmatprep.subr.mxu0 0.0
      %1449 = vmatpush1.msra.mxu0 0.0
      %1450 = vmatprep.subr.mxu0 0.0
      %1451 = vmatpush1.msra.mxu0 0.0
      %1452 = vmatprep.subr.mxu0 0.0
      %1453 = vmatpush1.msra.mxu0 0.0
      %1454 = vmatprep.subr.mxu0 0.0
      %1455 = vmatpush1.msra.mxu0 0.0
      %1456 = vmatprep.mubr.f32.mxu0 0.0
      %v1457 = vand.u32 %v876, 4294901760
      %1458 = vmatmul.mubr.f32.gmra.mrb[0].mxu0 %v1457
      %v1459 = vpop.f32.mrb[0].mxu0
      %v1460 = vadd.f32 %v1333, %v1459
      %v1461 = vpop.f32.mrb[0].mxu0
      %1462 = vmatprep.mubr.f32.mxu0 0.0
      %v1463 = vand.u32 %v877, 4294901760
      %1464 = vmatmul.mubr.f32.gmra.mrb[0].mxu0 %v1463
      %v1465 = vpop.f32.mrb[0].mxu0
      %v1466 = vadd.f32 %v1341, %v1465
      %v1467 = vpop.f32.mrb[0].mxu0
      %1468 = vdwg.mxu0
      %1469 = vmatprep.subr.mxu0 0.0
      %v1470 = vand.u32 %v176, 4294901760
      %1471 = vmatpush1.msra.mxu0 %v1470
      %1472 = vmatprep.subr.mxu0 0.0
      %v1473 = vand.u32 %v177, 4294901760
      %1474 = vmatpush1.msra.mxu0 %v1473
      %1475 = vmatprep.subr.mxu0 0.0
      %v1476 = vand.u32 %v178, 4294901760
      %1477 = vmatpush1.msra.mxu0 %v1476
      %1478 = vmatprep.subr.mxu0 0.0
      %v1479 = vand.u32 %v179, 4294901760
      %1480 = vmatpush1.msra.mxu0 %v1479
      %1481 = vmatprep.subr.mxu0 0.0
      %v1482 = vand.u32 %v180, 4294901760
      %1483 = vmatpush1.msra.mxu0 %v1482
      %1484 = vmatprep.subr.mxu0 0.0
      %v1485 = vand.u32 %v181, 4294901760
      %1486 = vmatpush1.msra.mxu0 %v1485
      %1487 = vmatprep.subr.mxu0 0.0
      %v1488 = vand.u32 %v182, 4294901760
      %1489 = vmatpush1.msra.mxu0 %v1488
      %1490 = vmatprep.subr.mxu0 0.0
      %v1491 = vand.u32 %v183, 4294901760
      %1492 = vmatpush1.msra.mxu0 %v1491
      %1493 = vmatprep.subr.mxu0 0.0
      %v1494 = vand.u32 %v184, 4294901760
      %1495 = vmatpush1.msra.mxu0 %v1494
      %1496 = vmatprep.subr.mxu0 0.0
      %v1497 = vand.u32 %v185, 4294901760
      %1498 = vmatpush1.msra.mxu0 %v1497
      %1499 = vmatprep.subr.mxu0 0.0
      %v1500 = vand.u32 %v186, 4294901760
      %1501 = vmatpush1.msra.mxu0 %v1500
      %1502 = vmatprep.subr.mxu0 0.0
      %v1503 = vand.u32 %v187, 4294901760
      %1504 = vmatpush1.msra.mxu0 %v1503
      %1505 = vmatprep.subr.mxu0 0.0
      %v1506 = vand.u32 %v188, 4294901760
      %1507 = vmatpush1.msra.mxu0 %v1506
      %1508 = vmatprep.subr.mxu0 0.0
      %v1509 = vand.u32 %v189, 4294901760
      %1510 = vmatpush1.msra.mxu0 %v1509
      %1511 = vmatprep.subr.mxu0 0.0
      %v1512 = vand.u32 %v190, 4294901760
      %1513 = vmatpush1.msra.mxu0 %v1512
      %1514 = vmatprep.subr.mxu0 0.0
      %v1515 = vand.u32 %v191, 4294901760
      %1516 = vmatpush1.msra.mxu0 %v1515
      %1517 = vmatprep.subr.mxu0 0.0
      %1518 = vmatpush1.msra.mxu0 0.0
      %1519 = vmatprep.subr.mxu0 0.0
      %1520 = vmatpush1.msra.mxu0 0.0
      %1521 = vmatprep.subr.mxu0 0.0
      %1522 = vmatpush1.msra.mxu0 0.0
      %1523 = vmatprep.subr.mxu0 0.0
      %1524 = vmatpush1.msra.mxu0 0.0
      %1525 = vmatprep.subr.mxu0 0.0
      %1526 = vmatpush1.msra.mxu0 0.0
      %1527 = vmatprep.subr.mxu0 0.0
      %1528 = vmatpush1.msra.mxu0 0.0
      %1529 = vmatprep.subr.mxu0 0.0
      %1530 = vmatpush1.msra.mxu0 0.0
      %1531 = vmatprep.subr.mxu0 0.0
      %1532 = vmatpush1.msra.mxu0 0.0
      %1533 = vmatprep.subr.mxu0 0.0
      %1534 = vmatpush1.msra.mxu0 0.0
      %1535 = vmatprep.subr.mxu0 0.0
      %1536 = vmatpush1.msra.mxu0 0.0
      %1537 = vmatprep.subr.mxu0 0.0
      %1538 = vmatpush1.msra.mxu0 0.0
      %1539 = vmatprep.subr.mxu0 0.0
      %1540 = vmatpush1.msra.mxu0 0.0
      %1541 = vmatprep.subr.mxu0 0.0
      %1542 = vmatpush1.msra.mxu0 0.0
      %1543 = vmatprep.subr.mxu0 0.0
      %1544 = vmatpush1.msra.mxu0 0.0
      %1545 = vmatprep.subr.mxu0 0.0
      %1546 = vmatpush1.msra.mxu0 0.0
      %1547 = vmatprep.subr.mxu0 0.0
      %1548 = vmatpush1.msra.mxu0 0.0
      %1549 = vmatprep.mubr.f32.mxu0 0.0
      %v1550 = vand.u32 %v876, 4294901760
      %1551 = vmatmul.mubr.f32.gmra.mrb[0].mxu0 %v1550
      %v1552 = vpop.f32.mrb[0].mxu0
      %v1553 = vadd.f32 %v1460, %v1552
      %v1554 = vpop.f32.mrb[0].mxu0
      %1555 = vmatprep.mubr.f32.mxu0 0.0
      %v1556 = vand.u32 %v877, 4294901760
      %1557 = vmatmul.mubr.f32.gmra.mrb[0].mxu0 %v1556
      %v1558 = vpop.f32.mrb[0].mxu0
      %v1559 = vadd.f32 %v1466, %v1558
      %v1560 = vpop.f32.mrb[0].mxu0
      %1561 = vdwg.mxu0
      %v1562 = vmul.f32 %v867, 0.03125
      %v1563 = vmul.f32 %v873, 0.03125
      %v1564 = vmul.f32 %v1553, 0.03125
      %v1565 = vmul.f32 %v1559, 0.03125
      %v1566 = vmul.f32 %v1562, %v1562
      %v1567 = vmul.f32 %v1563, %v1563
      %v1568 = vsub.f32 %v1564, %v1566
      %v1569 = vsub.f32 %v1565, %v1567
      %v1570 = vmax.f32 %v1568, 0.0
      %v1571 = vmax.f32 %v1569, 0.0
      %v1572 = vadd.f32 %v1570, 1e-05
      %v1573 = vadd.f32 %v1571, 1e-05
      %v1574 = vrsqrt.pop %v1572
      %v1575 = vrsqrt.pop %v1573
      %v1576 = vld [vmem:[%s1] sm:$0x1]
      %v1578 = vlaneseq
      %v1579 = vshrl.u32 %v1578, 7
      %v1580 = vsub.s32 0, %v1579
      %v1581 = vrot.slane %v1576, %v1580
      %v1583 = vmul.f32 %v1574, %v1581
      %v1584 = vmul.f32 %v1575, %v1581
      %v1585 = vadd.f32 %v1583, 1.0
      %v1586 = vadd.f32 %v1584, 1.0
      %v1587 = vmul.f32 %v174, %v1585
      %v1588 = vmul.f32 %v175, %v1586
      %1589 = vst [vmem:[%s172] sm:$0xff] %v1587
      %1590 = vst [vmem:[%s172 + $0x8] sm:$0xff] %v1588
      %s1591 = smul.u32 2, %s14
      %p1592 = scmp.lt.s32.totalorder %s1591, 15
      %s1593 = scalar_select %p1592, %s1591, 15
      %s1594 = smul.addr %s1593, 8
      %s1595 = scalar_lea.vmem %s3, %s1594
      // Predicated region
      $region33: #{shortcut_block.1} parent=31 // pred_check
        %p1596 = pneg %p100
      $region34: #{shortcut_block.1} parent=31 // pred_check_branch
        %1598 = sbr.rel (%p1596) target = $region36
      $region35: #{shortcut_block.1} parent=31 // pred_region
        %s1599 = smul.u32 2, %s14
      $region36: #{shortcut_block.1} parent=31 // pred_fallthru
        _
    $region32: #{shortcut_block.1} parent=5 // pred_fallthru
      _
    %p1600 = scmp.le.s32.totalorder 2, %s9
    // Predicated region
    $region37: #{shortcut_block.1} parent=5 // pred_check
      %p1601 = pneg %p1600
    $region38: #{shortcut_block.1} parent=5 // pred_check_branch
      %1603 = sbr.rel (%p1601) target = $region40
    $region39: #{shortcut_block.1} parent=5 // pred_region
      %s1604 = ssub.s32 %s9, 2
      // Predicated region
      $region41: #{shortcut_block.1} parent=39 // pred_check
        %p1605 = pneg %p106
      $region42: #{shortcut_block.1} parent=39 // pred_check_branch
        %1607 = sbr.rel (%p1605) target = $region44
      $region43: #{shortcut_block.1} parent=39 // pred_region
        %s1608 = smul.u32 2, %s15
        %p1609 = scmp.lt.s32.totalorder %s1608, 15
        %s1610 = scalar_select %p1609, %s1608, 15
        %s1611 = smul.addr %s1610, 8
        %s1612 = scalar_lea.vmem %s3, %s1611
      $region44: #{shortcut_block.1} parent=39 // pred_fallthru
        _
    $region40: #{shortcut_block.1} parent=5 // pred_fallthru
      _
  $region6: #{shortcut_block.1} parent=0 // loop_footer
    %s13 = sadd.s32 1, %s9
  $region7: #{shortcut_block.1} parent=0 // loop_footer_branch
    %8 = sbr.rel target = $region3
  $region8: #{shortcut_block.1} parent=0 // loop_exit
    _

</llo_original>
